<compile_context>
chip_gen: v7x
topology: tpu7x:2x2x1
jax: 0.10.0
libtpu: 0.0.40
codegen_flags: <defaults>
</compile_context>

<pallas_src>
import functools
import math

import jax
import jax.numpy as jnp
import numpy as np
from jax.experimental import pallas as pl
from jax.experimental.pallas import tpu as pltpu


def _attn_model_kernel(
    q_ref, src_ref, kv_ref, maskb_ref,
    wq_ref, wk_ref, wv_ref, seg_ref, segt_ref,
    fcw_ref, fcb_ref, lng_ref, lnb_ref,
    fc1a_ref, fc1b_ref, fc1c_ref, fc2w_ref, fc2b_ref,
    out_ref, attn_ref, *, ln_eps):
    f32 = jnp.float32
    bf16 = jnp.bfloat16
    bB = q_ref.shape[0]            # batch elements in this block
    R = kv_ref.shape[0]            # bB * N rows of neighbors
    N = R // bB
    HD = wk_ref.shape[1]           # n_head * d_k = d_model
    H = seg_ref.shape[1]           # n_head

    # ---- fused K/V projections: one deep bf16 MXU matmul each ----
    kv = kv_ref[...]                                                     # [R, d_model] bf16
    k_flat = jnp.dot(kv, wk_ref[...], preferred_element_type=f32)        # [R, HD] f32
    v_flat = jnp.dot(kv, wv_ref[...], preferred_element_type=f32)        # [R, HD] f32

    # ---- Q projection (scale folded into wq); q_res kept f32 for the residual ----
    q_res = q_ref[...]                                                   # [bB, HD] f32
    q_proj = jnp.dot(q_res.astype(bf16), wq_ref[...],
                     preferred_element_type=f32)                         # [bB, HD] f32

    # ---- per-head scores: q broadcast over N neighbors is a free leading-dim
    #      reshape + sublane broadcast; each head's d_k lanes are segment-summed
    #      with a tiny constant 0/1 matrix on the MXU (no per-head lane slicing,
    #      no k transpose) ----
    prod = (k_flat.reshape(bB, N, HD) * q_proj[:, None, :]).reshape(R, HD)
    scores2 = jnp.dot(prod.astype(bf16), seg_ref[...],
                      preferred_element_type=f32)                        # [R, H]
    scores2 = scores2 + maskb_ref[...]                                   # additive -1e10 mask bias

    # ---- softmax over neighbors (f32) ----
    scores = scores2.reshape(bB, N, H)
    m = jnp.max(scores, axis=1, keepdims=True)
    e = jnp.exp(scores - m)
    s = jnp.sum(e, axis=1, keepdims=True)
    attn = e * pl.reciprocal(s, approx=True)                             # [bB, N, H]
    # TODO(synk): attention dropout omitted (identity in eval mode).
    attn2 = attn.reshape(R, H)
    attn_ref[...] = attn2                                                # dense [R, H] store

    # ---- attention-weighted V: broadcast head weights over d_v lanes with seg^T
    #      on the MXU, then reduce over neighbors with a sublane sum (no selector
    #      matmul) ----
    attn_w = jnp.dot(attn2.astype(bf16), segt_ref[...],
                     preferred_element_type=f32)                         # [R, HD]
    heads = jnp.sum((attn_w * v_flat).reshape(bB, N, HD), axis=1)        # [bB, HD]

    # ---- output projection + residual + LayerNorm (f32 stats) ----
    proj = (jnp.dot(heads.astype(bf16), fcw_ref[...], preferred_element_type=f32)
            + fcb_ref[...])
    x = proj + q_res
    mu = jnp.mean(x, axis=-1, keepdims=True)
    var = jnp.mean((x - mu) ** 2, axis=-1, keepdims=True)
    ln = (x - mu) * jax.lax.rsqrt(var + ln_eps) * lng_ref[...] + lnb_ref[...]

    # ---- MergeLayer without the lane-axis concat: fc1 split into two slabs ----
    h1 = jnp.maximum(
        jnp.dot(ln.astype(bf16), fc1a_ref[...], preferred_element_type=f32)
        + jnp.dot(src_ref[...], fc1b_ref[...], preferred_element_type=f32)
        + fc1c_ref[...], 0.0)
    out_ref[...] = (jnp.dot(h1.astype(bf16), fc2w_ref[...], preferred_element_type=f32)
                    + fc2b_ref[...])


def _num_tensorcores():
    """2 TensorCores per chip on v7x-class parts; 1 on v5e/v6e."""
    try:
        kind = jax.devices()[0].device_kind.lower()
    except Exception:
        return 1
    return 2 if ("v7" in kind or "7x" in kind) else 1


def _pick_block_b(B, N, num_cores):
    """Batch block size: 8-aligned divisor of B (or B itself), targeting
    R = bB*N in ~[256, 1024] rows per step; keep >= num_cores grid steps only
    when each step still has >= 256 rows."""
    divs = sorted({d for d in range(8, B + 1, 8) if B % d == 0} | {B})
    cand = [d for d in divs if d * N <= 1024] or [min(divs)]
    pref = [d for d in cand if d * N >= 256]
    multi = [d for d in (pref or cand) if B // d >= num_cores and d * N >= 256]
    if multi:
        return max(multi)
    if pref:
        return min(pref)
    return max(cand)


def attn_model_forward(params, src, src_t, seq, seq_t, seq_e, mask, *, n_head):
    """Build glue tensors, launch the fused Pallas kernel, fix up layouts."""
    B, N, feat_dim = seq.shape
    edge_dim = seq_e.shape[-1]
    time_dim = seq_t.shape[-1]
    d_model = feat_dim + edge_dim + time_dim
    d_k = d_model // n_head
    bf16 = jnp.bfloat16
    f32 = jnp.float32

    bB = _pick_block_b(B, N, _num_tensorcores())
    grid = (B // bB,)
    R = bB * N

    # q = [src || 0 || src_t]  (tiny [B, d_model] tensor; also the residual, f32)
    q_full = jnp.concatenate([src, jnp.zeros_like(src), src_t[:, 0, :]], axis=1)
    src16 = src.astype(bf16)

    # neighbor inputs concatenated ONCE to a [B*N, d_model] bf16 slab so K/V are
    # single deep MXU matmuls in the kernel.
    kv16 = jnp.concatenate([seq, seq_e, seq_t], axis=2).reshape(B * N, d_model).astype(bf16)

    # additive mask bias: -1e10 where masked, 0 elsewhere.
    maskb = jnp.where(mask, jnp.float32(-1e10), jnp.float32(0.0)).reshape(B * N, 1)

    # bf16 weights; fold 1/sqrt(d_k) into wq; split fc1 along the would-be concat.
    scale = 1.0 / math.sqrt(d_k)
    wq16 = (params["wq"] * scale).astype(bf16)
    wk16 = params["wk"].astype(bf16)
    wv16 = params["wv"].astype(bf16)
    fcw16 = params["fc_w"].astype(bf16)
    fc1a16 = params["fc1_w"][:d_model].astype(bf16)
    fc1b16 = params["fc1_w"][d_model:].astype(bf16)
    fc2w16 = params["fc2_w"].astype(bf16)

    # constant 0/1 head-segment matrices (bf16, MXU operands)
    head_of = jnp.arange(d_model) // d_k
    seg = (head_of[:, None] == jnp.arange(n_head)[None, :]).astype(bf16)   # [HD, H]
    segT = seg.T                                                           # [H, HD]

    kernel = functools.partial(_attn_model_kernel, ln_eps=1e-5)

    def wspec(shape):
        # Whole-array block, same block every grid step (weights stay resident).
        return pl.BlockSpec(shape, lambda b: (0,) * len(shape))

    out, attn_flat = pl.pallas_call(
        kernel,
        out_shape=(
            jax.ShapeDtypeStruct((B, feat_dim), f32),
            jax.ShapeDtypeStruct((B * N, n_head), f32),
        ),
        grid_spec=pltpu.PrefetchScalarGridSpec(
            num_scalar_prefetch=0,
            grid=grid,
            in_specs=[
                pl.BlockSpec((bB, d_model), lambda b: (b, 0)),        # q_full (f32 residual)
                pl.BlockSpec((bB, feat_dim), lambda b: (b, 0)),       # src (bf16)
                pl.BlockSpec((R, d_model), lambda b: (b, 0)),         # kv slab (bf16, flat)
                pl.BlockSpec((R, 1), lambda b: (b, 0)),               # mask bias (f32, flat)
                wspec(wq16.shape), wspec(wk16.shape), wspec(wv16.shape),
                wspec(seg.shape), wspec(segT.shape),
                wspec(fcw16.shape), wspec(params["fc_bias"].shape),
                wspec(params["ln_g"].shape), wspec(params["ln_b"].shape),
                wspec(fc1a16.shape), wspec(fc1b16.shape), wspec(params["fc1_bias"].shape),
                wspec(fc2w16.shape), wspec(params["fc2_bias"].shape),
            ],
            out_specs=[
                pl.BlockSpec((bB, feat_dim), lambda b: (b, 0)),
                pl.BlockSpec((R, n_head), lambda b: (b, 0)),
            ],
        ),
        compiler_params=pltpu.CompilerParams(dimension_semantics=("parallel",)),
    )(q_full, src16, kv16, maskb,
      wq16, wk16, wv16, seg, segT,
      fcw16, params["fc_bias"], params["ln_g"], params["ln_b"],
      fc1a16, fc1b16, params["fc1_bias"], fc2w16, params["fc2_bias"])

    # PyTorch returns attn of shape [n_head * B, N] with row index h*B + b; the
    # tiny layout fix-up is done once here (attention output is only B*N*H floats).
    attn2 = jnp.transpose(attn_flat.reshape(B, N, n_head), (2, 0, 1)).reshape(n_head * B, N)
    return out, attn2


def reference_forward(params, src, src_t, seq, seq_t, seq_e, mask, *, n_head):
    """Pure-JAX f32 re-implementation of the PyTorch forward (eval mode)."""
    src_ext = src[:, None, :]
    q = jnp.concatenate([src_ext, jnp.zeros_like(src_ext), src_t], axis=2)
    k = jnp.concatenate([seq, seq_e, seq_t], axis=2)
    B, len_q, d_model = q.shape
    N = k.shape[1]
    d_k = d_model // n_head

    qp = (q @ params["wq"]).reshape(B, len_q, n_head, d_k)
    kp = (k @ params["wk"]).reshape(B, N, n_head, d_k)
    vp = (k @ params["wv"]).reshape(B, N, n_head, d_k)
    qh = jnp.transpose(qp, (2, 0, 1, 3)).reshape(n_head * B, len_q, d_k)
    kh = jnp.transpose(kp, (2, 0, 1, 3)).reshape(n_head * B, N, d_k)
    vh = jnp.transpose(vp, (2, 0, 1, 3)).reshape(n_head * B, N, d_k)

    m = jnp.tile(mask[:, None, :], (n_head, 1, 1))                        # [H*B, 1, N]
    scores = jnp.einsum("bqd,bkd->bqk", qh, kh) / jnp.sqrt(jnp.float32(d_k))
    scores = jnp.where(m, -1e10, scores)
    attn = jax.nn.softmax(scores, axis=2)
    o = jnp.einsum("bqk,bkd->bqd", attn, vh)
    o = o.reshape(n_head, B, len_q, d_k).transpose(1, 2, 0, 3).reshape(B, len_q, -1)
    o = o @ params["fc_w"] + params["fc_bias"]
    x = o + q
    mu = x.mean(-1, keepdims=True)
    var = ((x - mu) ** 2).mean(-1, keepdims=True)
    ln = (x - mu) / jnp.sqrt(var + 1e-5) * params["ln_g"] + params["ln_b"]
    out = ln[:, 0, :]
    merged = jnp.concatenate([out, src], axis=1)
    h1 = jax.nn.relu(merged @ params["fc1_w"] + params["fc1_bias"])
    z = h1 @ params["fc2_w"] + params["fc2_bias"]
    return z, attn[:, 0, :]


if __name__ == "__main__":
    key = jax.random.PRNGKey(0)
    B, N = 16, 8
    feat_dim = edge_dim = time_dim = 32          # Dt == D, De == D as in the docstring
    n_head = 2
    d_model = feat_dim + edge_dim + time_dim     # 96, divisible by n_head

    keys = jax.random.split(key, 16)

    def nrm(k, shape, scale=0.1):
        return (scale * jax.random.normal(k, shape)).astype(jnp.float32)

    params = dict(
        wq=nrm(keys[0], (d_model, d_model)),                      # w_qs (no bias)
        wk=nrm(keys[1], (d_model, d_model)),                      # w_ks (no bias)
        wv=nrm(keys[2], (d_model, d_model)),                      # w_vs (no bias)
        fc_w=nrm(keys[3], (d_model, d_model)),                    # fc: n_head*d_v -> d_model
        fc_bias=nrm(keys[4], (1, d_model)),
        ln_g=jnp.ones((1, d_model), jnp.float32),                 # LayerNorm gamma
        ln_b=jnp.zeros((1, d_model), jnp.float32),                # LayerNorm beta
        fc1_w=nrm(keys[5], (d_model + feat_dim, feat_dim)),       # MergeLayer.fc1
        fc1_bias=nrm(keys[6], (1, feat_dim)),
        fc2_w=nrm(keys[7], (feat_dim, feat_dim)),                 # MergeLayer.fc2
        fc2_bias=nrm(keys[8], (1, feat_dim)),
    )

    src = nrm(keys[9], (B, feat_dim), 1.0)
    src_t = nrm(keys[10], (B, 1, time_dim), 1.0)   # time encoding of source ([B,1,Dt])
    seq = nrm(keys[11], (B, N, feat_dim), 1.0)
    seq_t = nrm(keys[12], (B, N, time_dim), 1.0)
    seq_e = nrm(keys[13], (B, N, edge_dim), 1.0)
    mask = jax.random.bernoulli(keys[14], 0.3, (B, N))
    mask = mask.at[:, 0].set(False)                # keep at least one valid neighbor

    out, attn = attn_model_forward(params, src, src_t, seq, seq_t, seq_e, mask,
                                   n_head=n_head)
    out = jax.block_until_ready(out)
    attn = jax.block_until_ready(attn)

    ref_out, ref_attn = reference_forward(params, src, src_t, seq, seq_t, seq_e, mask,
                                          n_head=n_head)
    # tolerance accounts for bf16 MXU inputs (f32 accumulation) throughout
    np.testing.assert_allclose(np.asarray(out), np.asarray(ref_out), rtol=3e-2, atol=3e-2)
    np.testing.assert_allclose(np.asarray(attn), np.asarray(ref_attn), rtol=3e-2, atol=3e-2)

    print("KERNEL_OK")
</pallas_src>

<mosaic_0001>
module attributes {stable_mosaic.version = 11 : i64} {
  func.func @_attn_model_kernel(%arg0: i32, %arg1: memref<16x96xf32, #tpu.memory_space<vmem>>, %arg2: memref<16x32xbf16, #tpu.memory_space<vmem>>, %arg3: memref<128x96xbf16, #tpu.memory_space<vmem>>, %arg4: memref<128x1xf32, #tpu.memory_space<vmem>>, %arg5: memref<96x96xbf16, #tpu.memory_space<vmem>>, %arg6: memref<96x96xbf16, #tpu.memory_space<vmem>>, %arg7: memref<96x96xbf16, #tpu.memory_space<vmem>>, %arg8: memref<96x2xbf16, #tpu.memory_space<vmem>>, %arg9: memref<2x96xbf16, #tpu.memory_space<vmem>>, %arg10: memref<96x96xbf16, #tpu.memory_space<vmem>>, %arg11: memref<1x96xf32, #tpu.memory_space<vmem>>, %arg12: memref<1x96xf32, #tpu.memory_space<vmem>>, %arg13: memref<1x96xf32, #tpu.memory_space<vmem>>, %arg14: memref<96x32xbf16, #tpu.memory_space<vmem>>, %arg15: memref<32x32xbf16, #tpu.memory_space<vmem>>, %arg16: memref<1x32xf32, #tpu.memory_space<vmem>>, %arg17: memref<32x32xbf16, #tpu.memory_space<vmem>>, %arg18: memref<1x32xf32, #tpu.memory_space<vmem>>, %arg19: memref<16x32xf32, #tpu.memory_space<vmem>>, %arg20: memref<128x2xf32, #tpu.memory_space<vmem>>) attributes {dimension_semantics = [#tpu.dimension_semantics<parallel>], iteration_bounds = array<i64: 1>, scalar_prefetch = 0 : i64, scratch_operands = 0 : i64, tpu.core_type = #tpu.core_type<tc>, window_params = [{transform_indices = @transform_0, window_bounds = array<i64: 16, 96>}, {transform_indices = @transform_1, window_bounds = array<i64: 16, 32>}, {transform_indices = @transform_2, window_bounds = array<i64: 128, 96>}, {transform_indices = @transform_3, window_bounds = array<i64: 128, 1>}, {pipeline_mode = #tpu.pipeline_mode<synchronous>, transform_indices = @transform_4, window_bounds = array<i64: 96, 96>}, {pipeline_mode = #tpu.pipeline_mode<synchronous>, transform_indices = @transform_5, window_bounds = array<i64: 96, 96>}, {pipeline_mode = #tpu.pipeline_mode<synchronous>, transform_indices = @transform_6, window_bounds = array<i64: 96, 96>}, {pipeline_mode = #tpu.pipeline_mode<synchronous>, transform_indices = @transform_7, window_bounds = array<i64: 96, 2>}, {pipeline_mode = #tpu.pipeline_mode<synchronous>, transform_indices = @transform_8, window_bounds = array<i64: 2, 96>}, {pipeline_mode = #tpu.pipeline_mode<synchronous>, transform_indices = @transform_9, window_bounds = array<i64: 96, 96>}, {pipeline_mode = #tpu.pipeline_mode<synchronous>, transform_indices = @transform_10, window_bounds = array<i64: 1, 96>}, {pipeline_mode = #tpu.pipeline_mode<synchronous>, transform_indices = @transform_11, window_bounds = array<i64: 1, 96>}, {pipeline_mode = #tpu.pipeline_mode<synchronous>, transform_indices = @transform_12, window_bounds = array<i64: 1, 96>}, {pipeline_mode = #tpu.pipeline_mode<synchronous>, transform_indices = @transform_13, window_bounds = array<i64: 96, 32>}, {pipeline_mode = #tpu.pipeline_mode<synchronous>, transform_indices = @transform_14, window_bounds = array<i64: 32, 32>}, {pipeline_mode = #tpu.pipeline_mode<synchronous>, transform_indices = @transform_15, window_bounds = array<i64: 1, 32>}, {pipeline_mode = #tpu.pipeline_mode<synchronous>, transform_indices = @transform_16, window_bounds = array<i64: 32, 32>}, {pipeline_mode = #tpu.pipeline_mode<synchronous>, transform_indices = @transform_17, window_bounds = array<i64: 1, 32>}, {transform_indices = @transform_18, window_bounds = array<i64: 16, 32>}, {transform_indices = @transform_19, window_bounds = array<i64: 128, 2>}]} {
    %c0 = arith.constant 0 : index
    %c0_0 = arith.constant 0 : index
    %0 = vector.load %arg3[%c0, %c0_0] : memref<128x96xbf16, #tpu.memory_space<vmem>>, vector<128x96xbf16>
    %c0_1 = arith.constant 0 : index
    %c0_2 = arith.constant 0 : index
    %1 = vector.load %arg6[%c0_1, %c0_2] : memref<96x96xbf16, #tpu.memory_space<vmem>>, vector<96x96xbf16>
    %cst = arith.constant dense<0.000000e+00> : vector<128x96xf32>
    %2 = tpu.matmul %0, %1, %cst {dimension_numbers = #tpu.dot_dimension_numbers<[1], [0], [0], [1], [0, 0, 1, 1], [], []>} : vector<128x96xbf16>, vector<96x96xbf16>, vector<128x96xf32> -> vector<128x96xf32>
    %c0_3 = arith.constant 0 : index
    %c0_4 = arith.constant 0 : index
    %3 = vector.load %arg7[%c0_3, %c0_4] : memref<96x96xbf16, #tpu.memory_space<vmem>>, vector<96x96xbf16>
    %cst_5 = arith.constant dense<0.000000e+00> : vector<128x96xf32>
    %4 = tpu.matmul %0, %3, %cst_5 {dimension_numbers = #tpu.dot_dimension_numbers<[1], [0], [0], [1], [0, 0, 1, 1], [], []>} : vector<128x96xbf16>, vector<96x96xbf16>, vector<128x96xf32> -> vector<128x96xf32>
    %c0_6 = arith.constant 0 : index
    %c0_7 = arith.constant 0 : index
    %5 = vector.load %arg1[%c0_6, %c0_7] : memref<16x96xf32, #tpu.memory_space<vmem>>, vector<16x96xf32>
    %6 = arith.truncf %5 : vector<16x96xf32> to vector<16x96xbf16>
    %c0_8 = arith.constant 0 : index
    %c0_9 = arith.constant 0 : index
    %7 = vector.load %arg5[%c0_8, %c0_9] : memref<96x96xbf16, #tpu.memory_space<vmem>>, vector<96x96xbf16>
    %cst_10 = arith.constant dense<0.000000e+00> : vector<16x96xf32>
    %8 = tpu.matmul %6, %7, %cst_10 {dimension_numbers = #tpu.dot_dimension_numbers<[1], [0], [0], [1], [0, 0, 1, 1], [], []>} : vector<16x96xbf16>, vector<96x96xbf16>, vector<16x96xf32> -> vector<16x96xf32>
    %9 = vector.shape_cast %2 : vector<128x96xf32> to vector<16x8x96xf32>
    %10 = vector.shape_cast %8 : vector<16x96xf32> to vector<16x1x96xf32>
    %11 = vector.broadcast %10 : vector<16x1x96xf32> to vector<16x8x96xf32>
    %12 = arith.mulf %9, %11 : vector<16x8x96xf32>
    %13 = vector.shape_cast %12 : vector<16x8x96xf32> to vector<128x96xf32>
    %14 = arith.truncf %13 : vector<128x96xf32> to vector<128x96xbf16>
    %c0_11 = arith.constant 0 : index
    %c0_12 = arith.constant 0 : index
    %15 = vector.load %arg8[%c0_11, %c0_12] : memref<96x2xbf16, #tpu.memory_space<vmem>>, vector<96x2xbf16>
    %cst_13 = arith.constant dense<0.000000e+00> : vector<128x2xf32>
    %16 = tpu.matmul %14, %15, %cst_13 {dimension_numbers = #tpu.dot_dimension_numbers<[1], [0], [0], [1], [0, 0, 1, 1], [], []>} : vector<128x96xbf16>, vector<96x2xbf16>, vector<128x2xf32> -> vector<128x2xf32>
    %c0_14 = arith.constant 0 : index
    %c0_15 = arith.constant 0 : index
    %17 = vector.load %arg4[%c0_14, %c0_15] : memref<128x1xf32, #tpu.memory_space<vmem>>, vector<128x1xf32>
    %18 = vector.broadcast %17 : vector<128x1xf32> to vector<128x2xf32>
    %19 = arith.addf %16, %18 : vector<128x2xf32>
    %20 = vector.shape_cast %19 : vector<128x2xf32> to vector<16x8x2xf32>
    %cst_16 = arith.constant dense<0xFF800000> : vector<16x2xf32>
    %21 = vector.multi_reduction <maximumf>, %20, %cst_16 [1] : vector<16x8x2xf32> to vector<16x2xf32>
    %22 = vector.shape_cast %21 : vector<16x2xf32> to vector<16x1x2xf32>
    %23 = vector.broadcast %22 : vector<16x1x2xf32> to vector<16x8x2xf32>
    %24 = arith.subf %20, %23 : vector<16x8x2xf32>
    %25 = math.exp %24 : vector<16x8x2xf32>
    %cst_17 = arith.constant dense<0.000000e+00> : vector<16x2xf32>
    %26 = vector.multi_reduction <add>, %25, %cst_17 [1] : vector<16x8x2xf32> to vector<16x2xf32>
    %27 = vector.shape_cast %26 : vector<16x2xf32> to vector<16x1x2xf32>
    %28 = tpu.reciprocal %27 {approx = true} : vector<16x1x2xf32> -> vector<16x1x2xf32>
    %29 = vector.broadcast %28 : vector<16x1x2xf32> to vector<16x8x2xf32>
    %30 = arith.mulf %25, %29 : vector<16x8x2xf32>
    %31 = vector.shape_cast %30 : vector<16x8x2xf32> to vector<128x2xf32>
    %c0_18 = arith.constant 0 : index
    %c0_19 = arith.constant 0 : index
    %32 = vector.load %arg20[%c0_18, %c0_19] : memref<128x2xf32, #tpu.memory_space<vmem>>, vector<128x2xf32>
    tpu.vector_store %arg20[%c0_18, %c0_19], %31 {strides = array<i32>} : memref<128x2xf32, #tpu.memory_space<vmem>>, vector<128x2xf32>,
    %33 = arith.truncf %31 : vector<128x2xf32> to vector<128x2xbf16>
    %c0_20 = arith.constant 0 : index
    %c0_21 = arith.constant 0 : index
    %34 = vector.load %arg9[%c0_20, %c0_21] : memref<2x96xbf16, #tpu.memory_space<vmem>>, vector<2x96xbf16>
    %cst_22 = arith.constant dense<0.000000e+00> : vector<128x96xf32>
    %35 = tpu.matmul %33, %34, %cst_22 {dimension_numbers = #tpu.dot_dimension_numbers<[1], [0], [0], [1], [0, 0, 1, 1], [], []>} : vector<128x2xbf16>, vector<2x96xbf16>, vector<128x96xf32> -> vector<128x96xf32>
    %36 = arith.mulf %35, %4 : vector<128x96xf32>
    %37 = vector.shape_cast %36 : vector<128x96xf32> to vector<16x8x96xf32>
    %cst_23 = arith.constant dense<0.000000e+00> : vector<16x96xf32>
    %38 = vector.multi_reduction <add>, %37, %cst_23 [1] : vector<16x8x96xf32> to vector<16x96xf32>
    %39 = arith.truncf %38 : vector<16x96xf32> to vector<16x96xbf16>
    %c0_24 = arith.constant 0 : index
    %c0_25 = arith.constant 0 : index
    %40 = vector.load %arg10[%c0_24, %c0_25] : memref<96x96xbf16, #tpu.memory_space<vmem>>, vector<96x96xbf16>
    %cst_26 = arith.constant dense<0.000000e+00> : vector<16x96xf32>
    %41 = tpu.matmul %39, %40, %cst_26 {dimension_numbers = #tpu.dot_dimension_numbers<[1], [0], [0], [1], [0, 0, 1, 1], [], []>} : vector<16x96xbf16>, vector<96x96xbf16>, vector<16x96xf32> -> vector<16x96xf32>
    %c0_27 = arith.constant 0 : index
    %c0_28 = arith.constant 0 : index
    %42 = vector.load %arg11[%c0_27, %c0_28] : memref<1x96xf32, #tpu.memory_space<vmem>>, vector<1x96xf32>
    %43 = vector.broadcast %42 : vector<1x96xf32> to vector<16x96xf32>
    %44 = arith.addf %41, %43 : vector<16x96xf32>
    %45 = arith.addf %44, %5 : vector<16x96xf32>
    %cst_29 = arith.constant dense<0.000000e+00> : vector<16xf32>
    %46 = vector.multi_reduction <add>, %45, %cst_29 [1] : vector<16x96xf32> to vector<16xf32>
    %47 = vector.shape_cast %46 : vector<16xf32> to vector<16x1xf32>
    %cst_30 = arith.constant 9.600000e+01 : f32
    %48 = vector.broadcast %cst_30 : f32 to vector<16x1xf32>
    %49 = arith.divf %47, %48 : vector<16x1xf32>
    %50 = vector.broadcast %49 : vector<16x1xf32> to vector<16x96xf32>
    %51 = arith.subf %45, %50 : vector<16x96xf32>
    %52 = arith.mulf %51, %51 : vector<16x96xf32>
    %cst_31 = arith.constant dense<0.000000e+00> : vector<16xf32>
    %53 = vector.multi_reduction <add>, %52, %cst_31 [1] : vector<16x96xf32> to vector<16xf32>
    %54 = vector.shape_cast %53 : vector<16xf32> to vector<16x1xf32>
    %cst_32 = arith.constant 9.600000e+01 : f32
    %55 = vector.broadcast %cst_32 : f32 to vector<16x1xf32>
    %56 = arith.divf %54, %55 : vector<16x1xf32>
    %57 = vector.broadcast %49 : vector<16x1xf32> to vector<16x96xf32>
    %58 = arith.subf %45, %57 : vector<16x96xf32>
    %cst_33 = arith.constant 9.99999974E-6 : f32
    %59 = vector.broadcast %cst_33 : f32 to vector<16x1xf32>
    %60 = arith.addf %56, %59 : vector<16x1xf32>
    %61 = math.rsqrt %60 : vector<16x1xf32>
    %62 = vector.broadcast %61 : vector<16x1xf32> to vector<16x96xf32>
    %63 = arith.mulf %58, %62 : vector<16x96xf32>
    %c0_34 = arith.constant 0 : index
    %c0_35 = arith.constant 0 : index
    %64 = vector.load %arg12[%c0_34, %c0_35] : memref<1x96xf32, #tpu.memory_space<vmem>>, vector<1x96xf32>
    %65 = vector.broadcast %64 : vector<1x96xf32> to vector<16x96xf32>
    %66 = arith.mulf %63, %65 : vector<16x96xf32>
    %c0_36 = arith.constant 0 : index
    %c0_37 = arith.constant 0 : index
    %67 = vector.load %arg13[%c0_36, %c0_37] : memref<1x96xf32, #tpu.memory_space<vmem>>, vector<1x96xf32>
    %68 = vector.broadcast %67 : vector<1x96xf32> to vector<16x96xf32>
    %69 = arith.addf %66, %68 : vector<16x96xf32>
    %70 = arith.truncf %69 : vector<16x96xf32> to vector<16x96xbf16>
    %c0_38 = arith.constant 0 : index
    %c0_39 = arith.constant 0 : index
    %71 = vector.load %arg14[%c0_38, %c0_39] : memref<96x32xbf16, #tpu.memory_space<vmem>>, vector<96x32xbf16>
    %cst_40 = arith.constant dense<0.000000e+00> : vector<16x32xf32>
    %72 = tpu.matmul %70, %71, %cst_40 {dimension_numbers = #tpu.dot_dimension_numbers<[1], [0], [0], [1], [0, 0, 1, 1], [], []>} : vector<16x96xbf16>, vector<96x32xbf16>, vector<16x32xf32> -> vector<16x32xf32>
    %c0_41 = arith.constant 0 : index
    %c0_42 = arith.constant 0 : index
    %73 = vector.load %arg2[%c0_41, %c0_42] : memref<16x32xbf16, #tpu.memory_space<vmem>>, vector<16x32xbf16>
    %c0_43 = arith.constant 0 : index
    %c0_44 = arith.constant 0 : index
    %74 = vector.load %arg15[%c0_43, %c0_44] : memref<32x32xbf16, #tpu.memory_space<vmem>>, vector<32x32xbf16>
    %cst_45 = arith.constant dense<0.000000e+00> : vector<16x32xf32>
    %75 = tpu.matmul %73, %74, %cst_45 {dimension_numbers = #tpu.dot_dimension_numbers<[1], [0], [0], [1], [0, 0, 1, 1], [], []>} : vector<16x32xbf16>, vector<32x32xbf16>, vector<16x32xf32> -> vector<16x32xf32>
    %76 = arith.addf %72, %75 : vector<16x32xf32>
    %c0_46 = arith.constant 0 : index
    %c0_47 = arith.constant 0 : index
    %77 = vector.load %arg16[%c0_46, %c0_47] : memref<1x32xf32, #tpu.memory_space<vmem>>, vector<1x32xf32>
    %78 = vector.broadcast %77 : vector<1x32xf32> to vector<16x32xf32>
    %79 = arith.addf %76, %78 : vector<16x32xf32>
    %cst_48 = arith.constant 0.000000e+00 : f32
    %80 = vector.broadcast %cst_48 : f32 to vector<16x32xf32>
    %81 = arith.maximumf %79, %80 : vector<16x32xf32>
    %82 = arith.truncf %81 : vector<16x32xf32> to vector<16x32xbf16>
    %c0_49 = arith.constant 0 : index
    %c0_50 = arith.constant 0 : index
    %83 = vector.load %arg17[%c0_49, %c0_50] : memref<32x32xbf16, #tpu.memory_space<vmem>>, vector<32x32xbf16>
    %cst_51 = arith.constant dense<0.000000e+00> : vector<16x32xf32>
    %84 = tpu.matmul %82, %83, %cst_51 {dimension_numbers = #tpu.dot_dimension_numbers<[1], [0], [0], [1], [0, 0, 1, 1], [], []>} : vector<16x32xbf16>, vector<32x32xbf16>, vector<16x32xf32> -> vector<16x32xf32>
    %c0_52 = arith.constant 0 : index
    %c0_53 = arith.constant 0 : index
    %85 = vector.load %arg18[%c0_52, %c0_53] : memref<1x32xf32, #tpu.memory_space<vmem>>, vector<1x32xf32>
    %86 = vector.broadcast %85 : vector<1x32xf32> to vector<16x32xf32>
    %87 = arith.addf %84, %86 : vector<16x32xf32>
    %c0_54 = arith.constant 0 : index
    %c0_55 = arith.constant 0 : index
    %88 = vector.load %arg19[%c0_54, %c0_55] : memref<16x32xf32, #tpu.memory_space<vmem>>, vector<16x32xf32>
    tpu.vector_store %arg19[%c0_54, %c0_55], %87 {strides = array<i32>} : memref<16x32xf32, #tpu.memory_space<vmem>>, vector<16x32xf32>,
    return
  }
  func.func @transform_0(%arg0: i32) -> (i32, i32) {
    %c0_i32 = arith.constant 0 : i32
    %c0_i32_0 = arith.constant 0 : i32
    return %arg0, %c0_i32 : i32, i32
  }
  func.func @transform_1(%arg0: i32) -> (i32, i32) {
    %c0_i32 = arith.constant 0 : i32
    %c0_i32_0 = arith.constant 0 : i32
    return %arg0, %c0_i32 : i32, i32
  }
  func.func @transform_2(%arg0: i32) -> (i32, i32) {
    %c0_i32 = arith.constant 0 : i32
    %c0_i32_0 = arith.constant 0 : i32
    return %arg0, %c0_i32 : i32, i32
  }
  func.func @transform_3(%arg0: i32) -> (i32, i32) {
    %c0_i32 = arith.constant 0 : i32
    %c0_i32_0 = arith.constant 0 : i32
    return %arg0, %c0_i32 : i32, i32
  }
  func.func @transform_4(%arg0: i32) -> (i32, i32) {
    %c0_i32 = arith.constant 0 : i32
    %c0_i32_0 = arith.constant 0 : i32
    %c0_i32_1 = arith.constant 0 : i32
    return %c0_i32, %c0_i32_0 : i32, i32
  }
  func.func @transform_5(%arg0: i32) -> (i32, i32) {
    %c0_i32 = arith.constant 0 : i32
    %c0_i32_0 = arith.constant 0 : i32
    %c0_i32_1 = arith.constant 0 : i32
    return %c0_i32, %c0_i32_0 : i32, i32
  }
  func.func @transform_6(%arg0: i32) -> (i32, i32) {
    %c0_i32 = arith.constant 0 : i32
    %c0_i32_0 = arith.constant 0 : i32
    %c0_i32_1 = arith.constant 0 : i32
    return %c0_i32, %c0_i32_0 : i32, i32
  }
  func.func @transform_7(%arg0: i32) -> (i32, i32) {
    %c0_i32 = arith.constant 0 : i32
    %c0_i32_0 = arith.constant 0 : i32
    %c0_i32_1 = arith.constant 0 : i32
    return %c0_i32, %c0_i32_0 : i32, i32
  }
  func.func @transform_8(%arg0: i32) -> (i32, i32) {
    %c0_i32 = arith.constant 0 : i32
    %c0_i32_0 = arith.constant 0 : i32
    %c0_i32_1 = arith.constant 0 : i32
    return %c0_i32, %c0_i32_0 : i32, i32
  }
  func.func @transform_9(%arg0: i32) -> (i32, i32) {
    %c0_i32 = arith.constant 0 : i32
    %c0_i32_0 = arith.constant 0 : i32
    %c0_i32_1 = arith.constant 0 : i32
    return %c0_i32, %c0_i32_0 : i32, i32
  }
  func.func @transform_10(%arg0: i32) -> (i32, i32) {
    %c0_i32 = arith.constant 0 : i32
    %c0_i32_0 = arith.constant 0 : i32
    %c0_i32_1 = arith.constant 0 : i32
    return %c0_i32, %c0_i32_0 : i32, i32
  }
  func.func @transform_11(%arg0: i32) -> (i32, i32) {
    %c0_i32 = arith.constant 0 : i32
    %c0_i32_0 = arith.constant 0 : i32
    %c0_i32_1 = arith.constant 0 : i32
    return %c0_i32, %c0_i32_0 : i32, i32
  }
  func.func @transform_12(%arg0: i32) -> (i32, i32) {
    %c0_i32 = arith.constant 0 : i32
    %c0_i32_0 = arith.constant 0 : i32
    %c0_i32_1 = arith.constant 0 : i32
    return %c0_i32, %c0_i32_0 : i32, i32
  }
  func.func @transform_13(%arg0: i32) -> (i32, i32) {
    %c0_i32 = arith.constant 0 : i32
    %c0_i32_0 = arith.constant 0 : i32
    %c0_i32_1 = arith.constant 0 : i32
    return %c0_i32, %c0_i32_0 : i32, i32
  }
  func.func @transform_14(%arg0: i32) -> (i32, i32) {
    %c0_i32 = arith.constant 0 : i32
    %c0_i32_0 = arith.constant 0 : i32
    %c0_i32_1 = arith.constant 0 : i32
    return %c0_i32, %c0_i32_0 : i32, i32
  }
  func.func @transform_15(%arg0: i32) -> (i32, i32) {
    %c0_i32 = arith.constant 0 : i32
    %c0_i32_0 = arith.constant 0 : i32
    %c0_i32_1 = arith.constant 0 : i32
    return %c0_i32, %c0_i32_0 : i32, i32
  }
  func.func @transform_16(%arg0: i32) -> (i32, i32) {
    %c0_i32 = arith.constant 0 : i32
    %c0_i32_0 = arith.constant 0 : i32
    %c0_i32_1 = arith.constant 0 : i32
    return %c0_i32, %c0_i32_0 : i32, i32
  }
  func.func @transform_17(%arg0: i32) -> (i32, i32) {
    %c0_i32 = arith.constant 0 : i32
    %c0_i32_0 = arith.constant 0 : i32
    %c0_i32_1 = arith.constant 0 : i32
    return %c0_i32, %c0_i32_0 : i32, i32
  }
  func.func @transform_18(%arg0: i32) -> (i32, i32) {
    %c0_i32 = arith.constant 0 : i32
    %c0_i32_0 = arith.constant 0 : i32
    return %arg0, %c0_i32 : i32, i32
  }
  func.func @transform_19(%arg0: i32) -> (i32, i32) {
    %c0_i32 = arith.constant 0 : i32
    %c0_i32_0 = arith.constant 0 : i32
    return %arg0, %c0_i32 : i32, i32
  }
}

</mosaic_0001>

<llo_original>
// kernel: tpu_custom_call.1
$region0: #{tpu_custom_call.1}
  #allocation0 [shape = 'u32[]', space=smem, size = 0x4, offset = 0x4, fixed_abs, tag = 'smem constant byte address 0x4 - core index']
  #allocation1 [shape = 'u32[144,128]{1,0:T(1,128)}', space=vmem, size = 0x12000, scoped, tag = 'internal scratch']
  %s0 = inlined_call_operand.vmem [shape: f32[16,96], index: 0, kind: input, shape index: {}]
  %s1 = inlined_call_operand.vmem [shape: bf16[16,32], index: 1, kind: input, shape index: {}]
  %s2 = inlined_call_operand.vmem [shape: bf16[128,96], index: 2, kind: input, shape index: {}]
  %s3 = inlined_call_operand.vmem [shape: f32[128,1], index: 3, kind: input, shape index: {}]
  %s4 = inlined_call_operand.vmem [shape: bf16[96,96], index: 4, kind: input, shape index: {}]
  %s5 = inlined_call_operand.vmem [shape: bf16[96,96], index: 5, kind: input, shape index: {}]
  %s6 = inlined_call_operand.vmem [shape: bf16[96,96], index: 6, kind: input, shape index: {}]
  %s7 = inlined_call_operand.vmem [shape: bf16[96,2], index: 7, kind: input, shape index: {}]
  %s8 = inlined_call_operand.vmem [shape: bf16[2,96], index: 8, kind: input, shape index: {}]
  %s9 = inlined_call_operand.vmem [shape: bf16[96,96], index: 9, kind: input, shape index: {}]
  %s10 = inlined_call_operand.vmem [shape: f32[1,96], index: 10, kind: input, shape index: {}]
  %s11 = inlined_call_operand.vmem [shape: f32[1,96], index: 11, kind: input, shape index: {}]
  %s12 = inlined_call_operand.vmem [shape: f32[1,96], index: 12, kind: input, shape index: {}]
  %s13 = inlined_call_operand.vmem [shape: bf16[96,32], index: 13, kind: input, shape index: {}]
  %s14 = inlined_call_operand.vmem [shape: bf16[32,32], index: 14, kind: input, shape index: {}]
  %s15 = inlined_call_operand.vmem [shape: f32[1,32], index: 15, kind: input, shape index: {}]
  %s16 = inlined_call_operand.vmem [shape: bf16[32,32], index: 16, kind: input, shape index: {}]
  %s17 = inlined_call_operand.vmem [shape: f32[1,32], index: 17, kind: input, shape index: {}]
  %s18 = inlined_call_operand.hbm [shape: f32[16,32], index: 18, kind: output, shape index: {0}]
  %s19 = inlined_call_operand.vmem [shape: f32[128,2], index: 19, kind: output, shape index: {1}]
  %20 = xla_tuple %s18, %s19
  %s21 = sld [smem:[#allocation0]]
  $region90: #{tpu_custom_call.1} parent=0
    _
  %s23 = ssub.s32 1, %s21
  %s24 = scalar_select 0, %s23, %s21
  $region1: #{tpu_custom_call.1} parent=0
    #allocation2 [shape = 'u8[8192]{0}', space=vmem, size = 0x2000, scoped, tag = 'output window, operand 0, single buffered']
    #allocation3 [shape = 's32[1]{0}', space=sflag, size = 0x4, scoped, tag = 'scoped memory for tpu_custom_call.1']
    %25 = vsyncpa [#allocation3], 0
    // Predicated region
    $region2: #{tpu_custom_call.1} parent=1 // pred_check
      _
    $region3: #{tpu_custom_call.1} parent=1 // pred_check_branch
      %27 = sbr.rel (0) target = $region5
    $region4: #{tpu_custom_call.1} parent=1 // pred_region
      _
    $region5: #{tpu_custom_call.1} parent=1 // pred_fallthru
      _
    // Predicated region
    $region6: #{tpu_custom_call.1} parent=1 // pred_check
      _
    $region7: #{tpu_custom_call.1} parent=1 // pred_check_branch
      %29 = sbr.rel (0) target = $region9
    $region8: #{tpu_custom_call.1} parent=1 // pred_region
      _
    $region9: #{tpu_custom_call.1} parent=1 // pred_fallthru
      _
    // Predicated region
    $region10: #{tpu_custom_call.1} parent=1 // pred_check
      _
    $region11: #{tpu_custom_call.1} parent=1 // pred_check_branch
      %31 = sbr.rel (0) target = $region13
    $region12: #{tpu_custom_call.1} parent=1 // pred_region
      _
    $region13: #{tpu_custom_call.1} parent=1 // pred_fallthru
      _
    // Predicated region
    $region14: #{tpu_custom_call.1} parent=1 // pred_check
      _
    $region15: #{tpu_custom_call.1} parent=1 // pred_check_branch
      %33 = sbr.rel (0) target = $region17
    $region16: #{tpu_custom_call.1} parent=1 // pred_region
      _
    $region17: #{tpu_custom_call.1} parent=1 // pred_fallthru
      _
    // Predicated region
    $region18: #{tpu_custom_call.1} parent=1 // pred_check
      _
    $region19: #{tpu_custom_call.1} parent=1 // pred_check_branch
      %35 = sbr.rel (0) target = $region21
    $region20: #{tpu_custom_call.1} parent=1 // pred_region
      _
    $region21: #{tpu_custom_call.1} parent=1 // pred_fallthru
      _
    // Predicated region
    $region22: #{tpu_custom_call.1} parent=1 // pred_check
      _
    $region23: #{tpu_custom_call.1} parent=1 // pred_check_branch
      %37 = sbr.rel (0) target = $region25
    $region24: #{tpu_custom_call.1} parent=1 // pred_region
      _
    $region25: #{tpu_custom_call.1} parent=1 // pred_fallthru
      _
    // Predicated region
    $region26: #{tpu_custom_call.1} parent=1 // pred_check
      _
    $region27: #{tpu_custom_call.1} parent=1 // pred_check_branch
      %39 = sbr.rel (0) target = $region29
    $region28: #{tpu_custom_call.1} parent=1 // pred_region
      _
    $region29: #{tpu_custom_call.1} parent=1 // pred_fallthru
      _
    // Predicated region
    $region30: #{tpu_custom_call.1} parent=1 // pred_check
      _
    $region31: #{tpu_custom_call.1} parent=1 // pred_check_branch
      %41 = sbr.rel (0) target = $region33
    $region32: #{tpu_custom_call.1} parent=1 // pred_region
      _
    $region33: #{tpu_custom_call.1} parent=1 // pred_fallthru
      _
    // Predicated region
    $region34: #{tpu_custom_call.1} parent=1 // pred_check
      _
    $region35: #{tpu_custom_call.1} parent=1 // pred_check_branch
      %43 = sbr.rel (0) target = $region37
    $region36: #{tpu_custom_call.1} parent=1 // pred_region
      _
    $region37: #{tpu_custom_call.1} parent=1 // pred_fallthru
      _
    // Predicated region
    $region38: #{tpu_custom_call.1} parent=1 // pred_check
      _
    $region39: #{tpu_custom_call.1} parent=1 // pred_check_branch
      %45 = sbr.rel (0) target = $region41
    $region40: #{tpu_custom_call.1} parent=1 // pred_region
      _
    $region41: #{tpu_custom_call.1} parent=1 // pred_fallthru
      _
    // Predicated region
    $region42: #{tpu_custom_call.1} parent=1 // pred_check
      _
    $region43: #{tpu_custom_call.1} parent=1 // pred_check_branch
      %47 = sbr.rel (0) target = $region45
    $region44: #{tpu_custom_call.1} parent=1 // pred_region
      _
    $region45: #{tpu_custom_call.1} parent=1 // pred_fallthru
      _
    // Predicated region
    $region46: #{tpu_custom_call.1} parent=1 // pred_check
      _
    $region47: #{tpu_custom_call.1} parent=1 // pred_check_branch
      %49 = sbr.rel (0) target = $region49
    $region48: #{tpu_custom_call.1} parent=1 // pred_region
      _
    $region49: #{tpu_custom_call.1} parent=1 // pred_fallthru
      _
    // Predicated region
    $region50: #{tpu_custom_call.1} parent=1 // pred_check
      _
    $region51: #{tpu_custom_call.1} parent=1 // pred_check_branch
      %51 = sbr.rel (0) target = $region53
    $region52: #{tpu_custom_call.1} parent=1 // pred_region
      _
    $region53: #{tpu_custom_call.1} parent=1 // pred_fallthru
      _
    // Predicated region
    $region54: #{tpu_custom_call.1} parent=1 // pred_check
      _
    $region55: #{tpu_custom_call.1} parent=1 // pred_check_branch
      %53 = sbr.rel (0) target = $region57
    $region56: #{tpu_custom_call.1} parent=1 // pred_region
      _
    $region57: #{tpu_custom_call.1} parent=1 // pred_fallthru
      _
    // Predicated region
    $region58: #{tpu_custom_call.1} parent=1 // pred_check
      _
    $region59: #{tpu_custom_call.1} parent=1 // pred_check_branch
      %55 = sbr.rel (0) target = $region61
    $region60: #{tpu_custom_call.1} parent=1 // pred_region
      _
    $region61: #{tpu_custom_call.1} parent=1 // pred_fallthru
      _
    // Predicated region
    $region62: #{tpu_custom_call.1} parent=1 // pred_check
      _
    $region63: #{tpu_custom_call.1} parent=1 // pred_check_branch
      %57 = sbr.rel (0) target = $region65
    $region64: #{tpu_custom_call.1} parent=1 // pred_region
      _
    $region65: #{tpu_custom_call.1} parent=1 // pred_fallthru
      _
    // Predicated region
    $region66: #{tpu_custom_call.1} parent=1 // pred_check
      _
    $region67: #{tpu_custom_call.1} parent=1 // pred_check_branch
      %59 = sbr.rel (0) target = $region69
    $region68: #{tpu_custom_call.1} parent=1 // pred_region
      _
    $region69: #{tpu_custom_call.1} parent=1 // pred_fallthru
      _
    // Predicated region
    $region70: #{tpu_custom_call.1} parent=1 // pred_check
      _
    $region71: #{tpu_custom_call.1} parent=1 // pred_check_branch
      %61 = sbr.rel (0) target = $region73
    $region72: #{tpu_custom_call.1} parent=1 // pred_region
      _
    $region73: #{tpu_custom_call.1} parent=1 // pred_fallthru
      _
    %v63 = vld [vmem:[%s2] sm:$0xf]
    %v64 = vld [vmem:[%s2 + $0x4] sm:$0xf]
    %v65 = vld [vmem:[%s2 + $0x8] sm:$0xf]
    %v66 = vld [vmem:[%s2 + $0xc] sm:$0xf]
    %v67 = vld [vmem:[%s2 + $0x10] sm:$0xf]
    %v68 = vld [vmem:[%s2 + $0x14] sm:$0xf]
    %v69 = vld [vmem:[%s2 + $0x18] sm:$0xf]
    %v70 = vld [vmem:[%s2 + $0x1c] sm:$0xf]
    %v71 = vld [vmem:[%s2 + $0x20] sm:$0xf]
    %v72 = vld [vmem:[%s2 + $0x24] sm:$0xf]
    %v73 = vld [vmem:[%s2 + $0x28] sm:$0xf]
    %v74 = vld [vmem:[%s2 + $0x2c] sm:$0xf]
    %v75 = vld [vmem:[%s2 + $0x30] sm:$0xf]
    %v76 = vld [vmem:[%s2 + $0x34] sm:$0xf]
    %v77 = vld [vmem:[%s2 + $0x38] sm:$0xf]
    %v78 = vld [vmem:[%s2 + $0x3c] sm:$0xf]
    %v79 = vld [vmem:[%s5] sm:$0xf]
    %v80 = vld [vmem:[%s5 + $0x4] sm:$0xf]
    %v81 = vld [vmem:[%s5 + $0x8] sm:$0xf]
    %v82 = vld [vmem:[%s5 + $0xc] sm:$0xf]
    %v83 = vld [vmem:[%s5 + $0x10] sm:$0xf]
    %v84 = vld [vmem:[%s5 + $0x14] sm:$0xf]
    %v85 = vld [vmem:[%s5 + $0x18] sm:$0xf]
    %v86 = vld [vmem:[%s5 + $0x1c] sm:$0xf]
    %v87 = vld [vmem:[%s5 + $0x20] sm:$0xf]
    %v88 = vld [vmem:[%s5 + $0x24] sm:$0xf]
    %v89 = vld [vmem:[%s5 + $0x28] sm:$0xf]
    %v90 = vld [vmem:[%s5 + $0x2c] sm:$0xf]
    %v107 = vunpack.c.l.b16 %v63
    %v108 = vunpack.c.l.b16 %v64
    %v109 = vunpack.c.l.b16 %v65
    %v110 = vunpack.c.l.b16 %v66
    %v111 = vunpack.c.l.b16 %v67
    %v112 = vunpack.c.l.b16 %v68
    %v113 = vunpack.c.l.b16 %v69
    %v114 = vunpack.c.l.b16 %v70
    %v115 = vunpack.c.l.b16 %v71
    %v116 = vunpack.c.l.b16 %v72
    %v117 = vunpack.c.l.b16 %v73
    %v118 = vunpack.c.l.b16 %v74
    %v119 = vunpack.c.l.b16 %v75
    %v120 = vunpack.c.l.b16 %v76
    %v121 = vunpack.c.l.b16 %v77
    %v122 = vunpack.c.l.b16 %v78
    %v123 = vpack.c.b16 %v108, %v107
    %v124 = vpack.c.b16 %v110, %v109
    %v125 = vpack.c.b16 %v112, %v111
    %v126 = vpack.c.b16 %v114, %v113
    %v127 = vpack.c.b16 %v116, %v115
    %v128 = vpack.c.b16 %v118, %v117
    %v129 = vpack.c.b16 %v120, %v119
    %v130 = vpack.c.b16 %v122, %v121
    %v143 = vunpack.c.l.b16 %v79
    %v144 = vunpack.c.l.b16 %v80
    %v145 = vunpack.c.l.b16 %v81
    %v146 = vunpack.c.l.b16 %v82
    %v147 = vunpack.c.l.b16 %v83
    %v148 = vunpack.c.l.b16 %v84
    %v149 = vunpack.c.l.b16 %v85
    %v150 = vunpack.c.l.b16 %v86
    %v151 = vunpack.c.l.b16 %v87
    %v152 = vunpack.c.l.b16 %v88
    %v153 = vunpack.c.l.b16 %v89
    %v154 = vunpack.c.l.b16 %v90
    %v155 = vpack.c.b16 %v144, %v143
    %v156 = vpack.c.b16 %v146, %v145
    %v157 = vpack.c.b16 %v148, %v147
    %v158 = vpack.c.b16 %v150, %v149
    %v159 = vpack.c.b16 %v152, %v151
    %v160 = vpack.c.b16 %v154, %v153
    %vm167 = vcmask 785408
    %v169 = vsel %vm167, %v123, 0
    %v172 = vsel %vm167, %v124, 0
    %v175 = vsel %vm167, %v125, 0
    %v178 = vsel %vm167, %v126, 0
    %v181 = vsel %vm167, %v127, 0
    %v184 = vsel %vm167, %v128, 0
    %v187 = vsel %vm167, %v129, 0
    %v190 = vsel %vm167, %v130, 0
    %192 = vmatprep.subr.bf16.mxu0 0
    %193 = vmatpush1.bf16.msra.mxu0 %v155
    %194 = vmatprep.subr.bf16.mxu0 0
    %195 = vmatpush1.bf16.msra.mxu0 %v156
    %196 = vmatprep.subr.bf16.mxu0 0
    %197 = vmatpush1.bf16.msra.mxu0 %v157
    %198 = vmatprep.subr.bf16.mxu0 0
    %199 = vmatpush1.bf16.msra.mxu0 %v158
    %200 = vmatprep.subr.bf16.mxu0 0
    %201 = vmatpush1.bf16.msra.mxu0 %v159
    %202 = vmatprep.subr.bf16.mxu0 0
    %203 = vmatpush1.bf16.msra.mxu0 %v160
    %204 = vmatprep.subr.bf16.mxu0 0
    %205 = vmatpush1.bf16.msra.mxu0 0
    %206 = vmatprep.subr.bf16.mxu0 0
    %207 = vmatpush1.bf16.msra.mxu0 0
    %208 = vmatprep.subr.bf16.mxu0 0
    %209 = vmatpush1.bf16.msra.mxu0 0
    %210 = vmatprep.subr.bf16.mxu0 0
    %211 = vmatpush1.bf16.msra.mxu0 0
    %212 = vmatprep.subr.bf16.mxu0 0
    %213 = vmatpush1.bf16.msra.mxu0 0
    %214 = vmatprep.subr.bf16.mxu0 0
    %215 = vmatpush1.bf16.msra.mxu0 0
    %216 = vmatprep.subr.bf16.mxu0 0
    %217 = vmatpush1.bf16.msra.mxu0 0
    %218 = vmatprep.subr.bf16.mxu0 0
    %219 = vmatpush1.bf16.msra.mxu0 0
    %220 = vmatprep.subr.bf16.mxu0 0
    %221 = vmatpush1.bf16.msra.mxu0 0
    %222 = vmatprep.subr.bf16.mxu0 0
    %223 = vmatpush1.bf16.msra.mxu0 0
    %224 = vmatprep.mubr.bf16.mxu0 0
    %225 = vmatmul.mubr.bf16.gmra.mrb[0].mxu0 %v169
    %v226 = vpop.f32.mrb[0].mxu0
    %v227 = vadd.f32 0.0, %v226
    %v228 = vpop.f32.mrb[0].mxu0
    %v229 = vpop.f32.mrb[0].mxu0
    %v230 = vadd.f32 0.0, %v229
    %v231 = vpop.f32.mrb[0].mxu0
    %232 = vmatprep.mubr.bf16.mxu0 0
    %233 = vmatmul.mubr.bf16.gmra.mrb[0].mxu0 %v172
    %v234 = vpop.f32.mrb[0].mxu0
    %v235 = vadd.f32 0.0, %v234
    %v236 = vpop.f32.mrb[0].mxu0
    %v237 = vpop.f32.mrb[0].mxu0
    %v238 = vadd.f32 0.0, %v237
    %v239 = vpop.f32.mrb[0].mxu0
    %240 = vmatprep.mubr.bf16.mxu0 0
    %241 = vmatmul.mubr.bf16.gmra.mrb[0].mxu0 %v175
    %v242 = vpop.f32.mrb[0].mxu0
    %v243 = vadd.f32 0.0, %v242
    %v244 = vpop.f32.mrb[0].mxu0
    %v245 = vpop.f32.mrb[0].mxu0
    %v246 = vadd.f32 0.0, %v245
    %v247 = vpop.f32.mrb[0].mxu0
    %248 = vmatprep.mubr.bf16.mxu0 0
    %249 = vmatmul.mubr.bf16.gmra.mrb[0].mxu0 %v178
    %v250 = vpop.f32.mrb[0].mxu0
    %v251 = vadd.f32 0.0, %v250
    %v252 = vpop.f32.mrb[0].mxu0
    %v253 = vpop.f32.mrb[0].mxu0
    %v254 = vadd.f32 0.0, %v253
    %v255 = vpop.f32.mrb[0].mxu0
    %256 = vmatprep.mubr.bf16.mxu0 0
    %257 = vmatmul.mubr.bf16.gmra.mrb[0].mxu0 %v181
    %v258 = vpop.f32.mrb[0].mxu0
    %v259 = vadd.f32 0.0, %v258
    %v260 = vpop.f32.mrb[0].mxu0
    %v261 = vpop.f32.mrb[0].mxu0
    %v262 = vadd.f32 0.0, %v261
    %v263 = vpop.f32.mrb[0].mxu0
    %264 = vmatprep.mubr.bf16.mxu0 0
    %265 = vmatmul.mubr.bf16.gmra.mrb[0].mxu0 %v184
    %v266 = vpop.f32.mrb[0].mxu0
    %v267 = vadd.f32 0.0, %v266
    %v268 = vpop.f32.mrb[0].mxu0
    %v269 = vpop.f32.mrb[0].mxu0
    %v270 = vadd.f32 0.0, %v269
    %v271 = vpop.f32.mrb[0].mxu0
    %272 = vmatprep.mubr.bf16.mxu0 0
    %273 = vmatmul.mubr.bf16.gmra.mrb[0].mxu0 %v187
    %v274 = vpop.f32.mrb[0].mxu0
    %v275 = vadd.f32 0.0, %v274
    %v276 = vpop.f32.mrb[0].mxu0
    %v277 = vpop.f32.mrb[0].mxu0
    %v278 = vadd.f32 0.0, %v277
    %v279 = vpop.f32.mrb[0].mxu0
    %280 = vmatprep.mubr.bf16.mxu0 0
    %281 = vmatmul.mubr.bf16.gmra.mrb[0].mxu0 %v190
    %v282 = vpop.f32.mrb[0].mxu0
    %v283 = vadd.f32 0.0, %v282
    %v284 = vpop.f32.mrb[0].mxu0
    %v285 = vpop.f32.mrb[0].mxu0
    %v286 = vadd.f32 0.0, %v285
    %v287 = vpop.f32.mrb[0].mxu0
    %288 = vdwg.mxu0
    %v289 = vld [vmem:[%s6] sm:$0xf]
    %v290 = vld [vmem:[%s6 + $0x4] sm:$0xf]
    %v291 = vld [vmem:[%s6 + $0x8] sm:$0xf]
    %v292 = vld [vmem:[%s6 + $0xc] sm:$0xf]
    %v293 = vld [vmem:[%s6 + $0x10] sm:$0xf]
    %v294 = vld [vmem:[%s6 + $0x14] sm:$0xf]
    %v295 = vld [vmem:[%s6 + $0x18] sm:$0xf]
    %v296 = vld [vmem:[%s6 + $0x1c] sm:$0xf]
    %v297 = vld [vmem:[%s6 + $0x20] sm:$0xf]
    %v298 = vld [vmem:[%s6 + $0x24] sm:$0xf]
    %v299 = vld [vmem:[%s6 + $0x28] sm:$0xf]
    %v300 = vld [vmem:[%s6 + $0x2c] sm:$0xf]
    %v313 = vunpack.c.l.b16 %v289
    %v314 = vunpack.c.l.b16 %v290
    %v315 = vunpack.c.l.b16 %v291
    %v316 = vunpack.c.l.b16 %v292
    %v317 = vunpack.c.l.b16 %v293
    %v318 = vunpack.c.l.b16 %v294
    %v319 = vunpack.c.l.b16 %v295
    %v320 = vunpack.c.l.b16 %v296
    %v321 = vunpack.c.l.b16 %v297
    %v322 = vunpack.c.l.b16 %v298
    %v323 = vunpack.c.l.b16 %v299
    %v324 = vunpack.c.l.b16 %v300
    %v325 = vpack.c.b16 %v314, %v313
    %v326 = vpack.c.b16 %v316, %v315
    %v327 = vpack.c.b16 %v318, %v317
    %v328 = vpack.c.b16 %v320, %v319
    %v329 = vpack.c.b16 %v322, %v321
    %v330 = vpack.c.b16 %v324, %v323
    %337 = vmatprep.subr.bf16.mxu0 0
    %338 = vmatpush1.bf16.msra.mxu0 %v325
    %339 = vmatprep.subr.bf16.mxu0 0
    %340 = vmatpush1.bf16.msra.mxu0 %v326
    %341 = vmatprep.subr.bf16.mxu0 0
    %342 = vmatpush1.bf16.msra.mxu0 %v327
    %343 = vmatprep.subr.bf16.mxu0 0
    %344 = vmatpush1.bf16.msra.mxu0 %v328
    %345 = vmatprep.subr.bf16.mxu0 0
    %346 = vmatpush1.bf16.msra.mxu0 %v329
    %347 = vmatprep.subr.bf16.mxu0 0
    %348 = vmatpush1.bf16.msra.mxu0 %v330
    %349 = vmatprep.subr.bf16.mxu0 0
    %350 = vmatpush1.bf16.msra.mxu0 0
    %351 = vmatprep.subr.bf16.mxu0 0
    %352 = vmatpush1.bf16.msra.mxu0 0
    %353 = vmatprep.subr.bf16.mxu0 0
    %354 = vmatpush1.bf16.msra.mxu0 0
    %355 = vmatprep.subr.bf16.mxu0 0
    %356 = vmatpush1.bf16.msra.mxu0 0
    %357 = vmatprep.subr.bf16.mxu0 0
    %358 = vmatpush1.bf16.msra.mxu0 0
    %359 = vmatprep.subr.bf16.mxu0 0
    %360 = vmatpush1.bf16.msra.mxu0 0
    %361 = vmatprep.subr.bf16.mxu0 0
    %362 = vmatpush1.bf16.msra.mxu0 0
    %363 = vmatprep.subr.bf16.mxu0 0
    %364 = vmatpush1.bf16.msra.mxu0 0
    %365 = vmatprep.subr.bf16.mxu0 0
    %366 = vmatpush1.bf16.msra.mxu0 0
    %367 = vmatprep.subr.bf16.mxu0 0
    %368 = vmatpush1.bf16.msra.mxu0 0
    %369 = vmatprep.mubr.bf16.mxu0 0
    %370 = vmatmul.mubr.bf16.gmra.mrb[0].mxu0 %v169
    %v371 = vpop.f32.mrb[0].mxu0
    %v372 = vadd.f32 0.0, %v371
    %v373 = vpop.f32.mrb[0].mxu0
    %v374 = vpop.f32.mrb[0].mxu0
    %v375 = vadd.f32 0.0, %v374
    %v376 = vpop.f32.mrb[0].mxu0
    %377 = vmatprep.mubr.bf16.mxu0 0
    %378 = vmatmul.mubr.bf16.gmra.mrb[0].mxu0 %v172
    %v379 = vpop.f32.mrb[0].mxu0
    %v380 = vadd.f32 0.0, %v379
    %v381 = vpop.f32.mrb[0].mxu0
    %v382 = vpop.f32.mrb[0].mxu0
    %v383 = vadd.f32 0.0, %v382
    %v384 = vpop.f32.mrb[0].mxu0
    %385 = vmatprep.mubr.bf16.mxu0 0
    %386 = vmatmul.mubr.bf16.gmra.mrb[0].mxu0 %v175
    %v387 = vpop.f32.mrb[0].mxu0
    %v388 = vadd.f32 0.0, %v387
    %v389 = vpop.f32.mrb[0].mxu0
    %v390 = vpop.f32.mrb[0].mxu0
    %v391 = vadd.f32 0.0, %v390
    %v392 = vpop.f32.mrb[0].mxu0
    %393 = vmatprep.mubr.bf16.mxu0 0
    %394 = vmatmul.mubr.bf16.gmra.mrb[0].mxu0 %v178
    %v395 = vpop.f32.mrb[0].mxu0
    %v396 = vadd.f32 0.0, %v395
    %v397 = vpop.f32.mrb[0].mxu0
    %v398 = vpop.f32.mrb[0].mxu0
    %v399 = vadd.f32 0.0, %v398
    %v400 = vpop.f32.mrb[0].mxu0
    %401 = vmatprep.mubr.bf16.mxu0 0
    %402 = vmatmul.mubr.bf16.gmra.mrb[0].mxu0 %v181
    %v403 = vpop.f32.mrb[0].mxu0
    %v404 = vadd.f32 0.0, %v403
    %v405 = vpop.f32.mrb[0].mxu0
    %v406 = vpop.f32.mrb[0].mxu0
    %v407 = vadd.f32 0.0, %v406
    %v408 = vpop.f32.mrb[0].mxu0
    %409 = vmatprep.mubr.bf16.mxu0 0
    %410 = vmatmul.mubr.bf16.gmra.mrb[0].mxu0 %v184
    %v411 = vpop.f32.mrb[0].mxu0
    %v412 = vadd.f32 0.0, %v411
    %v413 = vpop.f32.mrb[0].mxu0
    %v414 = vpop.f32.mrb[0].mxu0
    %v415 = vadd.f32 0.0, %v414
    %v416 = vpop.f32.mrb[0].mxu0
    %417 = vmatprep.mubr.bf16.mxu0 0
    %418 = vmatmul.mubr.bf16.gmra.mrb[0].mxu0 %v187
    %v419 = vpop.f32.mrb[0].mxu0
    %v420 = vadd.f32 0.0, %v419
    %v421 = vpop.f32.mrb[0].mxu0
    %v422 = vpop.f32.mrb[0].mxu0
    %v423 = vadd.f32 0.0, %v422
    %v424 = vpop.f32.mrb[0].mxu0
    %425 = vmatprep.mubr.bf16.mxu0 0
    %426 = vmatmul.mubr.bf16.gmra.mrb[0].mxu0 %v190
    %v427 = vpop.f32.mrb[0].mxu0
    %v428 = vadd.f32 0.0, %v427
    %v429 = vpop.f32.mrb[0].mxu0
    %v430 = vpop.f32.mrb[0].mxu0
    %v431 = vadd.f32 0.0, %v430
    %v432 = vpop.f32.mrb[0].mxu0
    %433 = vdwg.mxu0
    %v434 = vld [vmem:[%s0] sm:$0xff]
    %v435 = vld [vmem:[%s0 + $0x8] sm:$0xff]
    %v436 = vpack.c.bf16 %v435, %v434
    %v437 = vld [vmem:[%s4] sm:$0xf]
    %v438 = vld [vmem:[%s4 + $0x4] sm:$0xf]
    %v439 = vld [vmem:[%s4 + $0x8] sm:$0xf]
    %v440 = vld [vmem:[%s4 + $0xc] sm:$0xf]
    %v441 = vld [vmem:[%s4 + $0x10] sm:$0xf]
    %v442 = vld [vmem:[%s4 + $0x14] sm:$0xf]
    %v443 = vld [vmem:[%s4 + $0x18] sm:$0xf]
    %v444 = vld [vmem:[%s4 + $0x1c] sm:$0xf]
    %v445 = vld [vmem:[%s4 + $0x20] sm:$0xf]
    %v446 = vld [vmem:[%s4 + $0x24] sm:$0xf]
    %v447 = vld [vmem:[%s4 + $0x28] sm:$0xf]
    %v448 = vld [vmem:[%s4 + $0x2c] sm:$0xf]
    %v461 = vunpack.c.l.b16 %v437
    %v462 = vunpack.c.l.b16 %v438
    %v463 = vunpack.c.l.b16 %v439
    %v464 = vunpack.c.l.b16 %v440
    %v465 = vunpack.c.l.b16 %v441
    %v466 = vunpack.c.l.b16 %v442
    %v467 = vunpack.c.l.b16 %v443
    %v468 = vunpack.c.l.b16 %v444
    %v469 = vunpack.c.l.b16 %v445
    %v470 = vunpack.c.l.b16 %v446
    %v471 = vunpack.c.l.b16 %v447
    %v472 = vunpack.c.l.b16 %v448
    %v473 = vpack.c.b16 %v462, %v461
    %v474 = vpack.c.b16 %v464, %v463
    %v475 = vpack.c.b16 %v466, %v465
    %v476 = vpack.c.b16 %v468, %v467
    %v477 = vpack.c.b16 %v470, %v469
    %v478 = vpack.c.b16 %v472, %v471
    %v486 = vsel %vm167, %v436, 0
    %488 = vmatprep.subr.bf16.mxu0 0
    %489 = vmatpush1.bf16.msra.mxu0 %v473
    %490 = vmatprep.subr.bf16.mxu0 0
    %491 = vmatpush1.bf16.msra.mxu0 %v474
    %492 = vmatprep.subr.bf16.mxu0 0
    %493 = vmatpush1.bf16.msra.mxu0 %v475
    %494 = vmatprep.subr.bf16.mxu0 0
    %495 = vmatpush1.bf16.msra.mxu0 %v476
    %496 = vmatprep.subr.bf16.mxu0 0
    %497 = vmatpush1.bf16.msra.mxu0 %v477
    %498 = vmatprep.subr.bf16.mxu0 0
    %499 = vmatpush1.bf16.msra.mxu0 %v478
    %500 = vmatprep.subr.bf16.mxu0 0
    %501 = vmatpush1.bf16.msra.mxu0 0
    %502 = vmatprep.subr.bf16.mxu0 0
    %503 = vmatpush1.bf16.msra.mxu0 0
    %504 = vmatprep.subr.bf16.mxu0 0
    %505 = vmatpush1.bf16.msra.mxu0 0
    %506 = vmatprep.subr.bf16.mxu0 0
    %507 = vmatpush1.bf16.msra.mxu0 0
    %508 = vmatprep.subr.bf16.mxu0 0
    %509 = vmatpush1.bf16.msra.mxu0 0
    %510 = vmatprep.subr.bf16.mxu0 0
    %511 = vmatpush1.bf16.msra.mxu0 0
    %512 = vmatprep.subr.bf16.mxu0 0
    %513 = vmatpush1.bf16.msra.mxu0 0
    %514 = vmatprep.subr.bf16.mxu0 0
    %515 = vmatpush1.bf16.msra.mxu0 0
    %516 = vmatprep.subr.bf16.mxu0 0
    %517 = vmatpush1.bf16.msra.mxu0 0
    %518 = vmatprep.subr.bf16.mxu0 0
    %519 = vmatpush1.bf16.msra.mxu0 0
    %520 = vmatprep.mubr.bf16.mxu0 0
    %521 = vmatmul.mubr.bf16.gmra.mrb[0].mxu0 %v486
    %v522 = vpop.f32.mrb[0].mxu0
    %v523 = vadd.f32 0.0, %v522
    %v524 = vpop.f32.mrb[0].mxu0
    %v525 = vpop.f32.mrb[0].mxu0
    %v526 = vadd.f32 0.0, %v525
    %v527 = vpop.f32.mrb[0].mxu0
    %528 = vdwg.mxu0
    %v531 = vcombine.high %v523, %v523
    %v533 = vunpack.c.l.s4 1966171168
    %v534 = vunpack.c.0.s8 %v533
    %v535 = vlaneseq
    %v536 = vshrl.u32 %v535, 7
    %v537 = vsub.s32 %v534, %v536
    %v538 = vrot.slane %v523, %v537
    %v540 = vunpack.c.l.s4 1966171168
    %v541 = vunpack.c.0.s8 %v540
    %v542 = vlaneseq
    %v543 = vshrl.u32 %v542, 7
    %v544 = vsub.s32 %v541, %v543
    %v545 = vrot.slane %v531, %v544
    %v546 = vcombine.high %v538, %v538
    %v547 = vcombine.high %v545, %v545
    %v549 = vunpack.c.l.s4 1966171168
    %v550 = vunpack.c.0.s8 %v549
    %v551 = vlaneseq
    %v552 = vshrl.u32 %v551, 7
    %v553 = vsub.s32 %v550, %v552
    %v554 = vrot.slane %v538, %v553
    %v556 = vunpack.c.l.s4 1966171168
    %v557 = vunpack.c.0.s8 %v556
    %v558 = vlaneseq
    %v559 = vshrl.u32 %v558, 7
    %v560 = vsub.s32 %v557, %v559
    %v561 = vrot.slane %v545, %v560
    %v563 = vunpack.c.l.s4 1966171168
    %v564 = vunpack.c.0.s8 %v563
    %v565 = vlaneseq
    %v566 = vshrl.u32 %v565, 7
    %v567 = vsub.s32 %v564, %v566
    %v568 = vrot.slane %v546, %v567
    %v570 = vunpack.c.l.s4 1966171168
    %v571 = vunpack.c.0.s8 %v570
    %v572 = vlaneseq
    %v573 = vshrl.u32 %v572, 7
    %v574 = vsub.s32 %v571, %v573
    %v575 = vrot.slane %v547, %v574
    %v576 = vcombine.high %v554, %v554
    %v577 = vcombine.high %v561, %v561
    %v578 = vcombine.high %v568, %v568
    %v579 = vcombine.high %v575, %v575
    %v580 = vcombine.high %v526, %v526
    %v582 = vunpack.c.l.s4 1966171168
    %v583 = vunpack.c.0.s8 %v582
    %v584 = vlaneseq
    %v585 = vshrl.u32 %v584, 7
    %v586 = vsub.s32 %v583, %v585
    %v587 = vrot.slane %v526, %v586
    %v589 = vunpack.c.l.s4 1966171168
    %v590 = vunpack.c.0.s8 %v589
    %v591 = vlaneseq
    %v592 = vshrl.u32 %v591, 7
    %v593 = vsub.s32 %v590, %v592
    %v594 = vrot.slane %v580, %v593
    %v595 = vcombine.high %v587, %v587
    %v596 = vcombine.high %v594, %v594
    %v598 = vunpack.c.l.s4 1966171168
    %v599 = vunpack.c.0.s8 %v598
    %v600 = vlaneseq
    %v601 = vshrl.u32 %v600, 7
    %v602 = vsub.s32 %v599, %v601
    %v603 = vrot.slane %v587, %v602
    %v605 = vunpack.c.l.s4 1966171168
    %v606 = vunpack.c.0.s8 %v605
    %v607 = vlaneseq
    %v608 = vshrl.u32 %v607, 7
    %v609 = vsub.s32 %v606, %v608
    %v610 = vrot.slane %v594, %v609
    %v612 = vunpack.c.l.s4 1966171168
    %v613 = vunpack.c.0.s8 %v612
    %v614 = vlaneseq
    %v615 = vshrl.u32 %v614, 7
    %v616 = vsub.s32 %v613, %v615
    %v617 = vrot.slane %v595, %v616
    %v619 = vunpack.c.l.s4 1966171168
    %v620 = vunpack.c.0.s8 %v619
    %v621 = vlaneseq
    %v622 = vshrl.u32 %v621, 7
    %v623 = vsub.s32 %v620, %v622
    %v624 = vrot.slane %v596, %v623
    %v625 = vcombine.high %v603, %v603
    %v626 = vcombine.high %v610, %v610
    %v627 = vcombine.high %v617, %v617
    %v628 = vcombine.high %v624, %v624
    %v629 = vlaneseq
    %v630 = vshrl.u32 %v629, 7
    %v631 = vsub.s32 0, %v630
    %v632 = vrot.slane %v554, %v631
    %v633 = vlaneseq
    %v634 = vshrl.u32 %v633, 7
    %v635 = vsub.s32 0, %v634
    %v636 = vrot.slane %v568, %v635
    %v637 = vlaneseq
    %v638 = vshrl.u32 %v637, 7
    %v639 = vsub.s32 0, %v638
    %v640 = vrot.slane %v576, %v639
    %v641 = vlaneseq
    %v642 = vshrl.u32 %v641, 7
    %v643 = vsub.s32 0, %v642
    %v644 = vrot.slane %v578, %v643
    %v645 = vlaneseq
    %v646 = vshrl.u32 %v645, 7
    %v647 = vsub.s32 0, %v646
    %v648 = vrot.slane %v561, %v647
    %v649 = vlaneseq
    %v650 = vshrl.u32 %v649, 7
    %v651 = vsub.s32 0, %v650
    %v652 = vrot.slane %v575, %v651
    %v653 = vlaneseq
    %v654 = vshrl.u32 %v653, 7
    %v655 = vsub.s32 0, %v654
    %v656 = vrot.slane %v577, %v655
    %v657 = vlaneseq
    %v658 = vshrl.u32 %v657, 7
    %v659 = vsub.s32 0, %v658
    %v660 = vrot.slane %v579, %v659
    %v661 = vlaneseq
    %v662 = vshrl.u32 %v661, 7
    %v663 = vsub.s32 0, %v662
    %v664 = vrot.slane %v603, %v663
    %v665 = vlaneseq
    %v666 = vshrl.u32 %v665, 7
    %v667 = vsub.s32 0, %v666
    %v668 = vrot.slane %v617, %v667
    %v669 = vlaneseq
    %v670 = vshrl.u32 %v669, 7
    %v671 = vsub.s32 0, %v670
    %v672 = vrot.slane %v625, %v671
    %v673 = vlaneseq
    %v674 = vshrl.u32 %v673, 7
    %v675 = vsub.s32 0, %v674
    %v676 = vrot.slane %v627, %v675
    %v677 = vlaneseq
    %v678 = vshrl.u32 %v677, 7
    %v679 = vsub.s32 0, %v678
    %v680 = vrot.slane %v610, %v679
    %v681 = vlaneseq
    %v682 = vshrl.u32 %v681, 7
    %v683 = vsub.s32 0, %v682
    %v684 = vrot.slane %v624, %v683
    %v685 = vlaneseq
    %v686 = vshrl.u32 %v685, 7
    %v687 = vsub.s32 0, %v686
    %v688 = vrot.slane %v626, %v687
    %v689 = vlaneseq
    %v690 = vshrl.u32 %v689, 7
    %v691 = vsub.s32 0, %v690
    %v692 = vrot.slane %v628, %v691
    %v709 = vmul.f32 %v227, %v632
    %v710 = vmul.f32 %v230, %v636
    %v711 = vmul.f32 %v235, %v640
    %v712 = vmul.f32 %v238, %v644
    %v713 = vmul.f32 %v243, %v648
    %v714 = vmul.f32 %v246, %v652
    %v715 = vmul.f32 %v251, %v656
    %v716 = vmul.f32 %v254, %v660
    %v717 = vmul.f32 %v259, %v664
    %v718 = vmul.f32 %v262, %v668
    %v719 = vmul.f32 %v267, %v672
    %v720 = vmul.f32 %v270, %v676
    %v721 = vmul.f32 %v275, %v680
    %v722 = vmul.f32 %v278, %v684
    %v723 = vmul.f32 %v283, %v688
    %v724 = vmul.f32 %v286, %v692
    %v725 = vpack.c.bf16 %v710, %v709
    %v726 = vpack.c.bf16 %v712, %v711
    %v727 = vpack.c.bf16 %v714, %v713
    %v728 = vpack.c.bf16 %v716, %v715
    %v729 = vpack.c.bf16 %v718, %v717
    %v730 = vpack.c.bf16 %v720, %v719
    %v731 = vpack.c.bf16 %v722, %v721
    %v732 = vpack.c.bf16 %v724, %v723
    %v733 = vld [vmem:[%s7] sm:$0xf]
    %v734 = vld [vmem:[%s7 + $0x4] sm:$0xf]
    %v735 = vld [vmem:[%s7 + $0x8] sm:$0xf]
    %v736 = vld [vmem:[%s7 + $0xc] sm:$0xf]
    %v737 = vld [vmem:[%s7 + $0x10] sm:$0xf]
    %v738 = vld [vmem:[%s7 + $0x14] sm:$0xf]
    %v739 = vld [vmem:[%s7 + $0x18] sm:$0xf]
    %v740 = vld [vmem:[%s7 + $0x1c] sm:$0xf]
    %v741 = vld [vmem:[%s7 + $0x20] sm:$0xf]
    %v742 = vld [vmem:[%s7 + $0x24] sm:$0xf]
    %v743 = vld [vmem:[%s7 + $0x28] sm:$0xf]
    %v744 = vld [vmem:[%s7 + $0x2c] sm:$0xf]
    %v745 = vld [vmem:[%s3] sm:$0xff]
    %v746 = vld [vmem:[%s3 + $0x8] sm:$0xff]
    %v747 = vld [vmem:[%s3 + $0x10] sm:$0xff]
    %v748 = vld [vmem:[%s3 + $0x18] sm:$0xff]
    %v749 = vld [vmem:[%s3 + $0x20] sm:$0xff]
    %v750 = vld [vmem:[%s3 + $0x28] sm:$0xff]
    %v751 = vld [vmem:[%s3 + $0x30] sm:$0xff]
    %v752 = vld [vmem:[%s3 + $0x38] sm:$0xff]
    %v753 = vld [vmem:[%s3 + $0x40] sm:$0xff]
    %v754 = vld [vmem:[%s3 + $0x48] sm:$0xff]
    %v755 = vld [vmem:[%s3 + $0x50] sm:$0xff]
    %v756 = vld [vmem:[%s3 + $0x58] sm:$0xff]
    %v757 = vld [vmem:[%s3 + $0x60] sm:$0xff]
    %v758 = vld [vmem:[%s3 + $0x68] sm:$0xff]
    %v759 = vld [vmem:[%s3 + $0x70] sm:$0xff]
    %v760 = vld [vmem:[%s3 + $0x78] sm:$0xff]
    %762 = vset.pattern.permute.xlu0 0
    %763 = vperm.xlu0 %762, %v745
    %v764 = vpop.permute.xlu0 %763
    %767 = vset.pattern.permute.xlu0 0
    %768 = vperm.xlu0 %767, %v746
    %v769 = vpop.permute.xlu0 %768
    %772 = vset.pattern.permute.xlu0 0
    %773 = vperm.xlu0 %772, %v747
    %v774 = vpop.permute.xlu0 %773
    %777 = vset.pattern.permute.xlu0 0
    %778 = vperm.xlu0 %777, %v748
    %v779 = vpop.permute.xlu0 %778
    %782 = vset.pattern.permute.xlu0 0
    %783 = vperm.xlu0 %782, %v749
    %v784 = vpop.permute.xlu0 %783
    %787 = vset.pattern.permute.xlu0 0
    %788 = vperm.xlu0 %787, %v750
    %v789 = vpop.permute.xlu0 %788
    %792 = vset.pattern.permute.xlu0 0
    %793 = vperm.xlu0 %792, %v751
    %v794 = vpop.permute.xlu0 %793
    %797 = vset.pattern.permute.xlu0 0
    %798 = vperm.xlu0 %797, %v752
    %v799 = vpop.permute.xlu0 %798
    %802 = vset.pattern.permute.xlu0 0
    %803 = vperm.xlu0 %802, %v753
    %v804 = vpop.permute.xlu0 %803
    %807 = vset.pattern.permute.xlu0 0
    %808 = vperm.xlu0 %807, %v754
    %v809 = vpop.permute.xlu0 %808
    %812 = vset.pattern.permute.xlu0 0
    %813 = vperm.xlu0 %812, %v755
    %v814 = vpop.permute.xlu0 %813
    %817 = vset.pattern.permute.xlu0 0
    %818 = vperm.xlu0 %817, %v756
    %v819 = vpop.permute.xlu0 %818
    %822 = vset.pattern.permute.xlu0 0
    %823 = vperm.xlu0 %822, %v757
    %v824 = vpop.permute.xlu0 %823
    %827 = vset.pattern.permute.xlu0 0
    %828 = vperm.xlu0 %827, %v758
    %v829 = vpop.permute.xlu0 %828
    %832 = vset.pattern.permute.xlu0 0
    %833 = vperm.xlu0 %832, %v759
    %v834 = vpop.permute.xlu0 %833
    %837 = vset.pattern.permute.xlu0 0
    %838 = vperm.xlu0 %837, %v760
    %v839 = vpop.permute.xlu0 %838
    %v853 = vunpack.c.l.b16 %v733
    %v854 = vunpack.c.l.b16 %v734
    %v855 = vunpack.c.l.b16 %v735
    %v856 = vunpack.c.l.b16 %v736
    %v857 = vunpack.c.l.b16 %v737
    %v858 = vunpack.c.l.b16 %v738
    %v859 = vunpack.c.l.b16 %v739
    %v860 = vunpack.c.l.b16 %v740
    %v861 = vunpack.c.l.b16 %v741
    %v862 = vunpack.c.l.b16 %v742
    %v863 = vunpack.c.l.b16 %v743
    %v864 = vunpack.c.l.b16 %v744
    %v865 = vpack.c.b16 %v854, %v853
    %v866 = vpack.c.b16 %v856, %v855
    %v867 = vpack.c.b16 %v858, %v857
    %v868 = vpack.c.b16 %v860, %v859
    %v869 = vpack.c.b16 %v862, %v861
    %v870 = vpack.c.b16 %v864, %v863
    %v878 = vsel %vm167, %v725, 0
    %v881 = vsel %vm167, %v726, 0
    %v884 = vsel %vm167, %v727, 0
    %v887 = vsel %vm167, %v728, 0
    %v890 = vsel %vm167, %v729, 0
    %v893 = vsel %vm167, %v730, 0
    %v896 = vsel %vm167, %v731, 0
    %v899 = vsel %vm167, %v732, 0
    %901 = vmatprep.subr.bf16.mxu0 0
    %902 = vmatpush1.bf16.msra.mxu0 %v865
    %903 = vmatprep.subr.bf16.mxu0 0
    %904 = vmatpush1.bf16.msra.mxu0 %v866
    %905 = vmatprep.subr.bf16.mxu0 0
    %906 = vmatpush1.bf16.msra.mxu0 %v867
    %907 = vmatprep.subr.bf16.mxu0 0
    %908 = vmatpush1.bf16.msra.mxu0 %v868
    %909 = vmatprep.subr.bf16.mxu0 0
    %910 = vmatpush1.bf16.msra.mxu0 %v869
    %911 = vmatprep.subr.bf16.mxu0 0
    %912 = vmatpush1.bf16.msra.mxu0 %v870
    %913 = vmatprep.subr.bf16.mxu0 0
    %914 = vmatpush1.bf16.msra.mxu0 0
    %915 = vmatprep.subr.bf16.mxu0 0
    %916 = vmatpush1.bf16.msra.mxu0 0
    %917 = vmatprep.subr.bf16.mxu0 0
    %918 = vmatpush1.bf16.msra.mxu0 0
    %919 = vmatprep.subr.bf16.mxu0 0
    %920 = vmatpush1.bf16.msra.mxu0 0
    %921 = vmatprep.subr.bf16.mxu0 0
    %922 = vmatpush1.bf16.msra.mxu0 0
    %923 = vmatprep.subr.bf16.mxu0 0
    %924 = vmatpush1.bf16.msra.mxu0 0
    %925 = vmatprep.subr.bf16.mxu0 0
    %926 = vmatpush1.bf16.msra.mxu0 0
    %927 = vmatprep.subr.bf16.mxu0 0
    %928 = vmatpush1.bf16.msra.mxu0 0
    %929 = vmatprep.subr.bf16.mxu0 0
    %930 = vmatpush1.bf16.msra.mxu0 0
    %931 = vmatprep.subr.bf16.mxu0 0
    %932 = vmatpush1.bf16.msra.mxu0 0
    %933 = vmatprep.mubr.bf16.mxu0 0
    %934 = vmatmul.mubr.bf16.gmra.mrb[0].mxu0 %v878
    %v935 = vpop.f32.mrb[0].mxu0
    %v936 = vadd.f32 %v764, %v935
    %v937 = vpop.f32.mrb[0].mxu0
    %v938 = vpop.f32.mrb[0].mxu0
    %v939 = vadd.f32 %v769, %v938
    %v940 = vpop.f32.mrb[0].mxu0
    %941 = vmatprep.mubr.bf16.mxu0 0
    %942 = vmatmul.mubr.bf16.gmra.mrb[0].mxu0 %v881
    %v943 = vpop.f32.mrb[0].mxu0
    %v944 = vadd.f32 %v774, %v943
    %v945 = vpop.f32.mrb[0].mxu0
    %v946 = vpop.f32.mrb[0].mxu0
    %v947 = vadd.f32 %v779, %v946
    %v948 = vpop.f32.mrb[0].mxu0
    %949 = vmatprep.mubr.bf16.mxu0 0
    %950 = vmatmul.mubr.bf16.gmra.mrb[0].mxu0 %v884
    %v951 = vpop.f32.mrb[0].mxu0
    %v952 = vadd.f32 %v784, %v951
    %v953 = vpop.f32.mrb[0].mxu0
    %v954 = vpop.f32.mrb[0].mxu0
    %v955 = vadd.f32 %v789, %v954
    %v956 = vpop.f32.mrb[0].mxu0
    %957 = vmatprep.mubr.bf16.mxu0 0
    %958 = vmatmul.mubr.bf16.gmra.mrb[0].mxu0 %v887
    %v959 = vpop.f32.mrb[0].mxu0
    %v960 = vadd.f32 %v794, %v959
    %v961 = vpop.f32.mrb[0].mxu0
    %v962 = vpop.f32.mrb[0].mxu0
    %v963 = vadd.f32 %v799, %v962
    %v964 = vpop.f32.mrb[0].mxu0
    %965 = vmatprep.mubr.bf16.mxu0 0
    %966 = vmatmul.mubr.bf16.gmra.mrb[0].mxu0 %v890
    %v967 = vpop.f32.mrb[0].mxu0
    %v968 = vadd.f32 %v804, %v967
    %v969 = vpop.f32.mrb[0].mxu0
    %v970 = vpop.f32.mrb[0].mxu0
    %v971 = vadd.f32 %v809, %v970
    %v972 = vpop.f32.mrb[0].mxu0
    %973 = vmatprep.mubr.bf16.mxu0 0
    %974 = vmatmul.mubr.bf16.gmra.mrb[0].mxu0 %v893
    %v975 = vpop.f32.mrb[0].mxu0
    %v976 = vadd.f32 %v814, %v975
    %v977 = vpop.f32.mrb[0].mxu0
    %v978 = vpop.f32.mrb[0].mxu0
    %v979 = vadd.f32 %v819, %v978
    %v980 = vpop.f32.mrb[0].mxu0
    %981 = vmatprep.mubr.bf16.mxu0 0
    %982 = vmatmul.mubr.bf16.gmra.mrb[0].mxu0 %v896
    %v983 = vpop.f32.mrb[0].mxu0
    %v984 = vadd.f32 %v824, %v983
    %v985 = vpop.f32.mrb[0].mxu0
    %v986 = vpop.f32.mrb[0].mxu0
    %v987 = vadd.f32 %v829, %v986
    %v988 = vpop.f32.mrb[0].mxu0
    %989 = vmatprep.mubr.bf16.mxu0 0
    %990 = vmatmul.mubr.bf16.gmra.mrb[0].mxu0 %v899
    %v991 = vpop.f32.mrb[0].mxu0
    %v992 = vadd.f32 %v834, %v991
    %v993 = vpop.f32.mrb[0].mxu0
    %v994 = vpop.f32.mrb[0].mxu0
    %v995 = vadd.f32 %v839, %v994
    %v996 = vpop.f32.mrb[0].mxu0
    %997 = vdwg.mxu0
    %vm998 = vcmask 15360
    %v999 = vsel %vm998, %v936, -inf
    %v1000 = vrot.slane %v999, 4
    %v1001 = vmax.f32 %v999, %v1000
    %v1002 = vrot.slane %v1001, 2
    %v1003 = vmax.f32 %v1001, %v1002
    %v1004 = vrot.slane %v1003, 1
    %v1005 = vmax.f32 %v1003, %v1004
    %v1006 = vsel %vm998, %v939, -inf
    %v1007 = vrot.slane %v1006, 4
    %v1008 = vmax.f32 %v1006, %v1007
    %v1009 = vrot.slane %v1008, 2
    %v1010 = vmax.f32 %v1008, %v1009
    %v1011 = vrot.slane %v1010, 1
    %v1012 = vmax.f32 %v1010, %v1011
    %v1013 = vsel %vm998, %v944, -inf
    %v1014 = vrot.slane %v1013, 4
    %v1015 = vmax.f32 %v1013, %v1014
    %v1016 = vrot.slane %v1015, 2
    %v1017 = vmax.f32 %v1015, %v1016
    %v1018 = vrot.slane %v1017, 1
    %v1019 = vmax.f32 %v1017, %v1018
    %v1020 = vsel %vm998, %v947, -inf
    %v1021 = vrot.slane %v1020, 4
    %v1022 = vmax.f32 %v1020, %v1021
    %v1023 = vrot.slane %v1022, 2
    %v1024 = vmax.f32 %v1022, %v1023
    %v1025 = vrot.slane %v1024, 1
    %v1026 = vmax.f32 %v1024, %v1025
    %v1027 = vsel %vm998, %v952, -inf
    %v1028 = vrot.slane %v1027, 4
    %v1029 = vmax.f32 %v1027, %v1028
    %v1030 = vrot.slane %v1029, 2
    %v1031 = vmax.f32 %v1029, %v1030
    %v1032 = vrot.slane %v1031, 1
    %v1033 = vmax.f32 %v1031, %v1032
    %v1034 = vsel %vm998, %v955, -inf
    %v1035 = vrot.slane %v1034, 4
    %v1036 = vmax.f32 %v1034, %v1035
    %v1037 = vrot.slane %v1036, 2
    %v1038 = vmax.f32 %v1036, %v1037
    %v1039 = vrot.slane %v1038, 1
    %v1040 = vmax.f32 %v1038, %v1039
    %v1041 = vsel %vm998, %v960, -inf
    %v1042 = vrot.slane %v1041, 4
    %v1043 = vmax.f32 %v1041, %v1042
    %v1044 = vrot.slane %v1043, 2
    %v1045 = vmax.f32 %v1043, %v1044
    %v1046 = vrot.slane %v1045, 1
    %v1047 = vmax.f32 %v1045, %v1046
    %v1048 = vsel %vm998, %v963, -inf
    %v1049 = vrot.slane %v1048, 4
    %v1050 = vmax.f32 %v1048, %v1049
    %v1051 = vrot.slane %v1050, 2
    %v1052 = vmax.f32 %v1050, %v1051
    %v1053 = vrot.slane %v1052, 1
    %v1054 = vmax.f32 %v1052, %v1053
    %v1055 = vsel %vm998, %v968, -inf
    %v1056 = vrot.slane %v1055, 4
    %v1057 = vmax.f32 %v1055, %v1056
    %v1058 = vrot.slane %v1057, 2
    %v1059 = vmax.f32 %v1057, %v1058
    %v1060 = vrot.slane %v1059, 1
    %v1061 = vmax.f32 %v1059, %v1060
    %v1062 = vsel %vm998, %v971, -inf
    %v1063 = vrot.slane %v1062, 4
    %v1064 = vmax.f32 %v1062, %v1063
    %v1065 = vrot.slane %v1064, 2
    %v1066 = vmax.f32 %v1064, %v1065
    %v1067 = vrot.slane %v1066, 1
    %v1068 = vmax.f32 %v1066, %v1067
    %v1069 = vsel %vm998, %v976, -inf
    %v1070 = vrot.slane %v1069, 4
    %v1071 = vmax.f32 %v1069, %v1070
    %v1072 = vrot.slane %v1071, 2
    %v1073 = vmax.f32 %v1071, %v1072
    %v1074 = vrot.slane %v1073, 1
    %v1075 = vmax.f32 %v1073, %v1074
    %v1076 = vsel %vm998, %v979, -inf
    %v1077 = vrot.slane %v1076, 4
    %v1078 = vmax.f32 %v1076, %v1077
    %v1079 = vrot.slane %v1078, 2
    %v1080 = vmax.f32 %v1078, %v1079
    %v1081 = vrot.slane %v1080, 1
    %v1082 = vmax.f32 %v1080, %v1081
    %v1083 = vsel %vm998, %v984, -inf
    %v1084 = vrot.slane %v1083, 4
    %v1085 = vmax.f32 %v1083, %v1084
    %v1086 = vrot.slane %v1085, 2
    %v1087 = vmax.f32 %v1085, %v1086
    %v1088 = vrot.slane %v1087, 1
    %v1089 = vmax.f32 %v1087, %v1088
    %v1090 = vsel %vm998, %v987, -inf
    %v1091 = vrot.slane %v1090, 4
    %v1092 = vmax.f32 %v1090, %v1091
    %v1093 = vrot.slane %v1092, 2
    %v1094 = vmax.f32 %v1092, %v1093
    %v1095 = vrot.slane %v1094, 1
    %v1096 = vmax.f32 %v1094, %v1095
    %v1097 = vsel %vm998, %v992, -inf
    %v1098 = vrot.slane %v1097, 4
    %v1099 = vmax.f32 %v1097, %v1098
    %v1100 = vrot.slane %v1099, 2
    %v1101 = vmax.f32 %v1099, %v1100
    %v1102 = vrot.slane %v1101, 1
    %v1103 = vmax.f32 %v1101, %v1102
    %v1104 = vsel %vm998, %v995, -inf
    %v1105 = vrot.slane %v1104, 4
    %v1106 = vmax.f32 %v1104, %v1105
    %v1107 = vrot.slane %v1106, 2
    %v1108 = vmax.f32 %v1106, %v1107
    %v1109 = vrot.slane %v1108, 1
    %v1110 = vmax.f32 %v1108, %v1109
    %v1111 = vsub.f32 %v936, %v1005
    %v1112 = vsub.f32 %v939, %v1012
    %v1113 = vsub.f32 %v944, %v1019
    %v1114 = vsub.f32 %v947, %v1026
    %v1115 = vsub.f32 %v952, %v1033
    %v1116 = vsub.f32 %v955, %v1040
    %v1117 = vsub.f32 %v960, %v1047
    %v1118 = vsub.f32 %v963, %v1054
    %v1119 = vsub.f32 %v968, %v1061
    %v1120 = vsub.f32 %v971, %v1068
    %v1121 = vsub.f32 %v976, %v1075
    %v1122 = vsub.f32 %v979, %v1082
    %v1123 = vsub.f32 %v984, %v1089
    %v1124 = vsub.f32 %v987, %v1096
    %v1125 = vsub.f32 %v992, %v1103
    %v1126 = vsub.f32 %v995, %v1110
    %v1127 = vmul.f32 %v1111, 1.442695
    %v1128 = vpow.pop %v1127
    %v1129 = vmul.f32 %v1112, 1.442695
    %v1130 = vpow.pop %v1129
    %v1131 = vmul.f32 %v1113, 1.442695
    %v1132 = vpow.pop %v1131
    %v1133 = vmul.f32 %v1114, 1.442695
    %v1134 = vpow.pop %v1133
    %v1135 = vmul.f32 %v1115, 1.442695
    %v1136 = vpow.pop %v1135
    %v1137 = vmul.f32 %v1116, 1.442695
    %v1138 = vpow.pop %v1137
    %v1139 = vmul.f32 %v1117, 1.442695
    %v1140 = vpow.pop %v1139
    %v1141 = vmul.f32 %v1118, 1.442695
    %v1142 = vpow.pop %v1141
    %v1143 = vmul.f32 %v1119, 1.442695
    %v1144 = vpow.pop %v1143
    %v1145 = vmul.f32 %v1120, 1.442695
    %v1146 = vpow.pop %v1145
    %v1147 = vmul.f32 %v1121, 1.442695
    %v1148 = vpow.pop %v1147
    %v1149 = vmul.f32 %v1122, 1.442695
    %v1150 = vpow.pop %v1149
    %v1151 = vmul.f32 %v1123, 1.442695
    %v1152 = vpow.pop %v1151
    %v1153 = vmul.f32 %v1124, 1.442695
    %v1154 = vpow.pop %v1153
    %v1155 = vmul.f32 %v1125, 1.442695
    %v1156 = vpow.pop %v1155
    %v1157 = vmul.f32 %v1126, 1.442695
    %v1158 = vpow.pop %v1157
    %v1159 = vsel %vm998, %v1128, 0.0
    %v1160 = vrot.slane %v1159, 4
    %v1161 = vadd.f32 %v1159, %v1160
    %v1162 = vrot.slane %v1161, 2
    %v1163 = vadd.f32 %v1161, %v1162
    %v1164 = vrot.slane %v1163, 1
    %v1165 = vadd.f32 %v1163, %v1164
    %v1166 = vsel %vm998, %v1130, 0.0
    %v1167 = vrot.slane %v1166, 4
    %v1168 = vadd.f32 %v1166, %v1167
    %v1169 = vrot.slane %v1168, 2
    %v1170 = vadd.f32 %v1168, %v1169
    %v1171 = vrot.slane %v1170, 1
    %v1172 = vadd.f32 %v1170, %v1171
    %v1173 = vsel %vm998, %v1132, 0.0
    %v1174 = vrot.slane %v1173, 4
    %v1175 = vadd.f32 %v1173, %v1174
    %v1176 = vrot.slane %v1175, 2
    %v1177 = vadd.f32 %v1175, %v1176
    %v1178 = vrot.slane %v1177, 1
    %v1179 = vadd.f32 %v1177, %v1178
    %v1180 = vsel %vm998, %v1134, 0.0
    %v1181 = vrot.slane %v1180, 4
    %v1182 = vadd.f32 %v1180, %v1181
    %v1183 = vrot.slane %v1182, 2
    %v1184 = vadd.f32 %v1182, %v1183
    %v1185 = vrot.slane %v1184, 1
    %v1186 = vadd.f32 %v1184, %v1185
    %v1187 = vsel %vm998, %v1136, 0.0
    %v1188 = vrot.slane %v1187, 4
    %v1189 = vadd.f32 %v1187, %v1188
    %v1190 = vrot.slane %v1189, 2
    %v1191 = vadd.f32 %v1189, %v1190
    %v1192 = vrot.slane %v1191, 1
    %v1193 = vadd.f32 %v1191, %v1192
    %v1194 = vsel %vm998, %v1138, 0.0
    %v1195 = vrot.slane %v1194, 4
    %v1196 = vadd.f32 %v1194, %v1195
    %v1197 = vrot.slane %v1196, 2
    %v1198 = vadd.f32 %v1196, %v1197
    %v1199 = vrot.slane %v1198, 1
    %v1200 = vadd.f32 %v1198, %v1199
    %v1201 = vsel %vm998, %v1140, 0.0
    %v1202 = vrot.slane %v1201, 4
    %v1203 = vadd.f32 %v1201, %v1202
    %v1204 = vrot.slane %v1203, 2
    %v1205 = vadd.f32 %v1203, %v1204
    %v1206 = vrot.slane %v1205, 1
    %v1207 = vadd.f32 %v1205, %v1206
    %v1208 = vsel %vm998, %v1142, 0.0
    %v1209 = vrot.slane %v1208, 4
    %v1210 = vadd.f32 %v1208, %v1209
    %v1211 = vrot.slane %v1210, 2
    %v1212 = vadd.f32 %v1210, %v1211
    %v1213 = vrot.slane %v1212, 1
    %v1214 = vadd.f32 %v1212, %v1213
    %v1215 = vsel %vm998, %v1144, 0.0
    %v1216 = vrot.slane %v1215, 4
    %v1217 = vadd.f32 %v1215, %v1216
    %v1218 = vrot.slane %v1217, 2
    %v1219 = vadd.f32 %v1217, %v1218
    %v1220 = vrot.slane %v1219, 1
    %v1221 = vadd.f32 %v1219, %v1220
    %v1222 = vsel %vm998, %v1146, 0.0
    %v1223 = vrot.slane %v1222, 4
    %v1224 = vadd.f32 %v1222, %v1223
    %v1225 = vrot.slane %v1224, 2
    %v1226 = vadd.f32 %v1224, %v1225
    %v1227 = vrot.slane %v1226, 1
    %v1228 = vadd.f32 %v1226, %v1227
    %v1229 = vsel %vm998, %v1148, 0.0
    %v1230 = vrot.slane %v1229, 4
    %v1231 = vadd.f32 %v1229, %v1230
    %v1232 = vrot.slane %v1231, 2
    %v1233 = vadd.f32 %v1231, %v1232
    %v1234 = vrot.slane %v1233, 1
    %v1235 = vadd.f32 %v1233, %v1234
    %v1236 = vsel %vm998, %v1150, 0.0
    %v1237 = vrot.slane %v1236, 4
    %v1238 = vadd.f32 %v1236, %v1237
    %v1239 = vrot.slane %v1238, 2
    %v1240 = vadd.f32 %v1238, %v1239
    %v1241 = vrot.slane %v1240, 1
    %v1242 = vadd.f32 %v1240, %v1241
    %v1243 = vsel %vm998, %v1152, 0.0
    %v1244 = vrot.slane %v1243, 4
    %v1245 = vadd.f32 %v1243, %v1244
    %v1246 = vrot.slane %v1245, 2
    %v1247 = vadd.f32 %v1245, %v1246
    %v1248 = vrot.slane %v1247, 1
    %v1249 = vadd.f32 %v1247, %v1248
    %v1250 = vsel %vm998, %v1154, 0.0
    %v1251 = vrot.slane %v1250, 4
    %v1252 = vadd.f32 %v1250, %v1251
    %v1253 = vrot.slane %v1252, 2
    %v1254 = vadd.f32 %v1252, %v1253
    %v1255 = vrot.slane %v1254, 1
    %v1256 = vadd.f32 %v1254, %v1255
    %v1257 = vsel %vm998, %v1156, 0.0
    %v1258 = vrot.slane %v1257, 4
    %v1259 = vadd.f32 %v1257, %v1258
    %v1260 = vrot.slane %v1259, 2
    %v1261 = vadd.f32 %v1259, %v1260
    %v1262 = vrot.slane %v1261, 1
    %v1263 = vadd.f32 %v1261, %v1262
    %v1264 = vsel %vm998, %v1158, 0.0
    %v1265 = vrot.slane %v1264, 4
    %v1266 = vadd.f32 %v1264, %v1265
    %v1267 = vrot.slane %v1266, 2
    %v1268 = vadd.f32 %v1266, %v1267
    %v1269 = vrot.slane %v1268, 1
    %v1270 = vadd.f32 %v1268, %v1269
    %v1271 = vrcp.pop %v1165
    %v1272 = vrcp.pop %v1172
    %v1273 = vrcp.pop %v1179
    %v1274 = vrcp.pop %v1186
    %v1275 = vrcp.pop %v1193
    %v1276 = vrcp.pop %v1200
    %v1277 = vrcp.pop %v1207
    %v1278 = vrcp.pop %v1214
    %v1279 = vrcp.pop %v1221
    %v1280 = vrcp.pop %v1228
    %v1281 = vrcp.pop %v1235
    %v1282 = vrcp.pop %v1242
    %v1283 = vrcp.pop %v1249
    %v1284 = vrcp.pop %v1256
    %v1285 = vrcp.pop %v1263
    %v1286 = vrcp.pop %v1270
    %v1287 = vmul.f32 %v1128, %v1271
    %v1288 = vmul.f32 %v1130, %v1272
    %v1289 = vmul.f32 %v1132, %v1273
    %v1290 = vmul.f32 %v1134, %v1274
    %v1291 = vmul.f32 %v1136, %v1275
    %v1292 = vmul.f32 %v1138, %v1276
    %v1293 = vmul.f32 %v1140, %v1277
    %v1294 = vmul.f32 %v1142, %v1278
    %v1295 = vmul.f32 %v1144, %v1279
    %v1296 = vmul.f32 %v1146, %v1280
    %v1297 = vmul.f32 %v1148, %v1281
    %v1298 = vmul.f32 %v1150, %v1282
    %v1299 = vmul.f32 %v1152, %v1283
    %v1300 = vmul.f32 %v1154, %v1284
    %v1301 = vmul.f32 %v1156, %v1285
    %v1302 = vmul.f32 %v1158, %v1286
    %1303 = vst.msk [vmem:[%s19] sm:$0xff] %vm998, %v1287
    %1304 = vst.msk [vmem:[%s19 + $0x8] sm:$0xff] %vm998, %v1288
    %1305 = vst.msk [vmem:[%s19 + $0x10] sm:$0xff] %vm998, %v1289
    %1306 = vst.msk [vmem:[%s19 + $0x18] sm:$0xff] %vm998, %v1290
    %1307 = vst.msk [vmem:[%s19 + $0x20] sm:$0xff] %vm998, %v1291
    %1308 = vst.msk [vmem:[%s19 + $0x28] sm:$0xff] %vm998, %v1292
    %1309 = vst.msk [vmem:[%s19 + $0x30] sm:$0xff] %vm998, %v1293
    %1310 = vst.msk [vmem:[%s19 + $0x38] sm:$0xff] %vm998, %v1294
    %1311 = vst.msk [vmem:[%s19 + $0x40] sm:$0xff] %vm998, %v1295
    %1312 = vst.msk [vmem:[%s19 + $0x48] sm:$0xff] %vm998, %v1296
    %1313 = vst.msk [vmem:[%s19 + $0x50] sm:$0xff] %vm998, %v1297
    %1314 = vst.msk [vmem:[%s19 + $0x58] sm:$0xff] %vm998, %v1298
    %1315 = vst.msk [vmem:[%s19 + $0x60] sm:$0xff] %vm998, %v1299
    %1316 = vst.msk [vmem:[%s19 + $0x68] sm:$0xff] %vm998, %v1300
    %1317 = vst.msk [vmem:[%s19 + $0x70] sm:$0xff] %vm998, %v1301
    %1318 = vst.msk [vmem:[%s19 + $0x78] sm:$0xff] %vm998, %v1302
    %v1319 = vpack.c.bf16 %v1288, %v1287
    %v1320 = vpack.c.bf16 %v1290, %v1289
    %v1321 = vpack.c.bf16 %v1292, %v1291
    %v1322 = vpack.c.bf16 %v1294, %v1293
    %v1323 = vpack.c.bf16 %v1296, %v1295
    %v1324 = vpack.c.bf16 %v1298, %v1297
    %v1325 = vpack.c.bf16 %v1300, %v1299
    %v1326 = vpack.c.bf16 %v1302, %v1301
    %v1327 = vld [vmem:[%s8] sm:$0x1]
    %v1329 = vsel %vm998, %v1319, 0
    %v1332 = vsel %vm998, %v1320, 0
    %v1335 = vsel %vm998, %v1321, 0
    %v1338 = vsel %vm998, %v1322, 0
    %v1341 = vsel %vm998, %v1323, 0
    %v1344 = vsel %vm998, %v1324, 0
    %v1347 = vsel %vm998, %v1325, 0
    %v1350 = vsel %vm998, %v1326, 0
    %vm1352 = vcmask 1040384
    %v1354 = vsel %vm1352, %v1327, 0
    %1356 = vmatprep.subr.bf16.mxu0 0
    %1357 = vmatpush1.bf16.msra.mxu0 %v1354
    %1358 = vmatprep.subr.bf16.mxu0 0
    %1359 = vmatpush1.bf16.msra.mxu0 0
    %1360 = vmatprep.subr.bf16.mxu0 0
    %1361 = vmatpush1.bf16.msra.mxu0 0
    %1362 = vmatprep.subr.bf16.mxu0 0
    %1363 = vmatpush1.bf16.msra.mxu0 0
    %1364 = vmatprep.subr.bf16.mxu0 0
    %1365 = vmatpush1.bf16.msra.mxu0 0
    %1366 = vmatprep.subr.bf16.mxu0 0
    %1367 = vmatpush1.bf16.msra.mxu0 0
    %1368 = vmatprep.subr.bf16.mxu0 0
    %1369 = vmatpush1.bf16.msra.mxu0 0
    %1370 = vmatprep.subr.bf16.mxu0 0
    %1371 = vmatpush1.bf16.msra.mxu0 0
    %1372 = vmatprep.subr.bf16.mxu0 0
    %1373 = vmatpush1.bf16.msra.mxu0 0
    %1374 = vmatprep.subr.bf16.mxu0 0
    %1375 = vmatpush1.bf16.msra.mxu0 0
    %1376 = vmatprep.subr.bf16.mxu0 0
    %1377 = vmatpush1.bf16.msra.mxu0 0
    %1378 = vmatprep.subr.bf16.mxu0 0
    %1379 = vmatpush1.bf16.msra.mxu0 0
    %1380 = vmatprep.subr.bf16.mxu0 0
    %1381 = vmatpush1.bf16.msra.mxu0 0
    %1382 = vmatprep.subr.bf16.mxu0 0
    %1383 = vmatpush1.bf16.msra.mxu0 0
    %1384 = vmatprep.subr.bf16.mxu0 0
    %1385 = vmatpush1.bf16.msra.mxu0 0
    %1386 = vmatprep.subr.bf16.mxu0 0
    %1387 = vmatpush1.bf16.msra.mxu0 0
    %1388 = vmatprep.mubr.bf16.mxu0 0
    %1389 = vmatmul.mubr.bf16.gmra.mrb[0].mxu0 %v1329
    %v1390 = vpop.f32.mrb[0].mxu0
    %v1391 = vadd.f32 0.0, %v1390
    %v1392 = vpop.f32.mrb[0].mxu0
    %v1393 = vpop.f32.mrb[0].mxu0
    %v1394 = vadd.f32 0.0, %v1393
    %v1395 = vpop.f32.mrb[0].mxu0
    %1396 = vmatprep.mubr.bf16.mxu0 0
    %1397 = vmatmul.mubr.bf16.gmra.mrb[0].mxu0 %v1332
    %v1398 = vpop.f32.mrb[0].mxu0
    %v1399 = vadd.f32 0.0, %v1398
    %v1400 = vpop.f32.mrb[0].mxu0
    %v1401 = vpop.f32.mrb[0].mxu0
    %v1402 = vadd.f32 0.0, %v1401
    %v1403 = vpop.f32.mrb[0].mxu0
    %1404 = vmatprep.mubr.bf16.mxu0 0
    %1405 = vmatmul.mubr.bf16.gmra.mrb[0].mxu0 %v1335
    %v1406 = vpop.f32.mrb[0].mxu0
    %v1407 = vadd.f32 0.0, %v1406
    %v1408 = vpop.f32.mrb[0].mxu0
    %v1409 = vpop.f32.mrb[0].mxu0
    %v1410 = vadd.f32 0.0, %v1409
    %v1411 = vpop.f32.mrb[0].mxu0
    %1412 = vmatprep.mubr.bf16.mxu0 0
    %1413 = vmatmul.mubr.bf16.gmra.mrb[0].mxu0 %v1338
    %v1414 = vpop.f32.mrb[0].mxu0
    %v1415 = vadd.f32 0.0, %v1414
    %v1416 = vpop.f32.mrb[0].mxu0
    %v1417 = vpop.f32.mrb[0].mxu0
    %v1418 = vadd.f32 0.0, %v1417
    %v1419 = vpop.f32.mrb[0].mxu0
    %1420 = vmatprep.mubr.bf16.mxu0 0
    %1421 = vmatmul.mubr.bf16.gmra.mrb[0].mxu0 %v1341
    %v1422 = vpop.f32.mrb[0].mxu0
    %v1423 = vadd.f32 0.0, %v1422
    %v1424 = vpop.f32.mrb[0].mxu0
    %v1425 = vpop.f32.mrb[0].mxu0
    %v1426 = vadd.f32 0.0, %v1425
    %v1427 = vpop.f32.mrb[0].mxu0
    %1428 = vmatprep.mubr.bf16.mxu0 0
    %1429 = vmatmul.mubr.bf16.gmra.mrb[0].mxu0 %v1344
    %v1430 = vpop.f32.mrb[0].mxu0
    %v1431 = vadd.f32 0.0, %v1430
    %v1432 = vpop.f32.mrb[0].mxu0
    %v1433 = vpop.f32.mrb[0].mxu0
    %v1434 = vadd.f32 0.0, %v1433
    %v1435 = vpop.f32.mrb[0].mxu0
    %1436 = vmatprep.mubr.bf16.mxu0 0
    %1437 = vmatmul.mubr.bf16.gmra.mrb[0].mxu0 %v1347
    %v1438 = vpop.f32.mrb[0].mxu0
    %v1439 = vadd.f32 0.0, %v1438
    %v1440 = vpop.f32.mrb[0].mxu0
    %v1441 = vpop.f32.mrb[0].mxu0
    %v1442 = vadd.f32 0.0, %v1441
    %v1443 = vpop.f32.mrb[0].mxu0
    %1444 = vmatprep.mubr.bf16.mxu0 0
    %1445 = vmatmul.mubr.bf16.gmra.mrb[0].mxu0 %v1350
    %v1446 = vpop.f32.mrb[0].mxu0
    %v1447 = vadd.f32 0.0, %v1446
    %v1448 = vpop.f32.mrb[0].mxu0
    %v1449 = vpop.f32.mrb[0].mxu0
    %v1450 = vadd.f32 0.0, %v1449
    %v1451 = vpop.f32.mrb[0].mxu0
    %1452 = vdwg.mxu0
    %v1453 = vmul.f32 %v1391, %v372
    %v1454 = vmul.f32 %v1394, %v375
    %v1455 = vmul.f32 %v1399, %v380
    %v1456 = vmul.f32 %v1402, %v383
    %v1457 = vmul.f32 %v1407, %v388
    %v1458 = vmul.f32 %v1410, %v391
    %v1459 = vmul.f32 %v1415, %v396
    %v1460 = vmul.f32 %v1418, %v399
    %v1461 = vmul.f32 %v1423, %v404
    %v1462 = vmul.f32 %v1426, %v407
    %v1463 = vmul.f32 %v1431, %v412
    %v1464 = vmul.f32 %v1434, %v415
    %v1465 = vmul.f32 %v1439, %v420
    %v1466 = vmul.f32 %v1442, %v423
    %v1467 = vmul.f32 %v1447, %v428
    %v1468 = vmul.f32 %v1450, %v431
    %v1469 = vsel %vm167, %v1453, 0.0
    %v1470 = vrot.slane %v1469, 4
    %v1471 = vadd.f32 %v1469, %v1470
    %v1472 = vrot.slane %v1471, 2
    %v1473 = vadd.f32 %v1471, %v1472
    %v1474 = vrot.slane %v1473, 1
    %v1475 = vadd.f32 %v1473, %v1474
    %v1476 = vsel %vm167, %v1454, 0.0
    %v1477 = vrot.slane %v1476, 4
    %v1478 = vadd.f32 %v1476, %v1477
    %v1479 = vrot.slane %v1478, 2
    %v1480 = vadd.f32 %v1478, %v1479
    %v1481 = vrot.slane %v1480, 1
    %v1482 = vadd.f32 %v1480, %v1481
    %v1483 = vsel %vm167, %v1455, 0.0
    %v1484 = vrot.slane %v1483, 4
    %v1485 = vadd.f32 %v1483, %v1484
    %v1486 = vrot.slane %v1485, 2
    %v1487 = vadd.f32 %v1485, %v1486
    %v1488 = vrot.slane %v1487, 1
    %v1489 = vadd.f32 %v1487, %v1488
    %v1490 = vsel %vm167, %v1456, 0.0
    %v1491 = vrot.slane %v1490, 4
    %v1492 = vadd.f32 %v1490, %v1491
    %v1493 = vrot.slane %v1492, 2
    %v1494 = vadd.f32 %v1492, %v1493
    %v1495 = vrot.slane %v1494, 1
    %v1496 = vadd.f32 %v1494, %v1495
    %v1497 = vsel %vm167, %v1457, 0.0
    %v1498 = vrot.slane %v1497, 4
    %v1499 = vadd.f32 %v1497, %v1498
    %v1500 = vrot.slane %v1499, 2
    %v1501 = vadd.f32 %v1499, %v1500
    %v1502 = vrot.slane %v1501, 1
    %v1503 = vadd.f32 %v1501, %v1502
    %v1504 = vsel %vm167, %v1458, 0.0
    %v1505 = vrot.slane %v1504, 4
    %v1506 = vadd.f32 %v1504, %v1505
    %v1507 = vrot.slane %v1506, 2
    %v1508 = vadd.f32 %v1506, %v1507
    %v1509 = vrot.slane %v1508, 1
    %v1510 = vadd.f32 %v1508, %v1509
    %v1511 = vsel %vm167, %v1459, 0.0
    %v1512 = vrot.slane %v1511, 4
    %v1513 = vadd.f32 %v1511, %v1512
    %v1514 = vrot.slane %v1513, 2
    %v1515 = vadd.f32 %v1513, %v1514
    %v1516 = vrot.slane %v1515, 1
    %v1517 = vadd.f32 %v1515, %v1516
    %v1518 = vsel %vm167, %v1460, 0.0
    %v1519 = vrot.slane %v1518, 4
    %v1520 = vadd.f32 %v1518, %v1519
    %v1521 = vrot.slane %v1520, 2
    %v1522 = vadd.f32 %v1520, %v1521
    %v1523 = vrot.slane %v1522, 1
    %v1524 = vadd.f32 %v1522, %v1523
    %v1525 = vsel %vm167, %v1461, 0.0
    %v1526 = vrot.slane %v1525, 4
    %v1527 = vadd.f32 %v1525, %v1526
    %v1528 = vrot.slane %v1527, 2
    %v1529 = vadd.f32 %v1527, %v1528
    %v1530 = vrot.slane %v1529, 1
    %v1531 = vadd.f32 %v1529, %v1530
    %v1532 = vsel %vm167, %v1462, 0.0
    %v1533 = vrot.slane %v1532, 4
    %v1534 = vadd.f32 %v1532, %v1533
    %v1535 = vrot.slane %v1534, 2
    %v1536 = vadd.f32 %v1534, %v1535
    %v1537 = vrot.slane %v1536, 1
    %v1538 = vadd.f32 %v1536, %v1537
    %v1539 = vsel %vm167, %v1463, 0.0
    %v1540 = vrot.slane %v1539, 4
    %v1541 = vadd.f32 %v1539, %v1540
    %v1542 = vrot.slane %v1541, 2
    %v1543 = vadd.f32 %v1541, %v1542
    %v1544 = vrot.slane %v1543, 1
    %v1545 = vadd.f32 %v1543, %v1544
    %v1546 = vsel %vm167, %v1464, 0.0
    %v1547 = vrot.slane %v1546, 4
    %v1548 = vadd.f32 %v1546, %v1547
    %v1549 = vrot.slane %v1548, 2
    %v1550 = vadd.f32 %v1548, %v1549
    %v1551 = vrot.slane %v1550, 1
    %v1552 = vadd.f32 %v1550, %v1551
    %v1553 = vsel %vm167, %v1465, 0.0
    %v1554 = vrot.slane %v1553, 4
    %v1555 = vadd.f32 %v1553, %v1554
    %v1556 = vrot.slane %v1555, 2
    %v1557 = vadd.f32 %v1555, %v1556
    %v1558 = vrot.slane %v1557, 1
    %v1559 = vadd.f32 %v1557, %v1558
    %v1560 = vsel %vm167, %v1466, 0.0
    %v1561 = vrot.slane %v1560, 4
    %v1562 = vadd.f32 %v1560, %v1561
    %v1563 = vrot.slane %v1562, 2
    %v1564 = vadd.f32 %v1562, %v1563
    %v1565 = vrot.slane %v1564, 1
    %v1566 = vadd.f32 %v1564, %v1565
    %v1567 = vsel %vm167, %v1467, 0.0
    %v1568 = vrot.slane %v1567, 4
    %v1569 = vadd.f32 %v1567, %v1568
    %v1570 = vrot.slane %v1569, 2
    %v1571 = vadd.f32 %v1569, %v1570
    %v1572 = vrot.slane %v1571, 1
    %v1573 = vadd.f32 %v1571, %v1572
    %v1574 = vsel %vm167, %v1468, 0.0
    %v1575 = vrot.slane %v1574, 4
    %v1576 = vadd.f32 %v1574, %v1575
    %v1577 = vrot.slane %v1576, 2
    %v1578 = vadd.f32 %v1576, %v1577
    %v1579 = vrot.slane %v1578, 1
    %v1580 = vadd.f32 %v1578, %v1579
    %v1581 = vpack.c.bf16 %v1475, %v1475
    %v1582 = vpack.c.bf16 %v1482, %v1482
    %v1583 = vpack.c.bf16 %v1489, %v1489
    %v1584 = vpack.c.bf16 %v1496, %v1496
    %v1585 = vpack.c.bf16 %v1503, %v1503
    %v1586 = vpack.c.bf16 %v1510, %v1510
    %v1587 = vpack.c.bf16 %v1517, %v1517
    %v1588 = vpack.c.bf16 %v1524, %v1524
    %v1589 = vpack.c.bf16 %v1531, %v1531
    %v1590 = vpack.c.bf16 %v1538, %v1538
    %v1591 = vpack.c.bf16 %v1545, %v1545
    %v1592 = vpack.c.bf16 %v1552, %v1552
    %v1593 = vpack.c.bf16 %v1559, %v1559
    %v1594 = vpack.c.bf16 %v1566, %v1566
    %v1595 = vpack.c.bf16 %v1573, %v1573
    %v1596 = vpack.c.bf16 %v1580, %v1580
    %v1597 = vld [vmem:[%s9] sm:$0xf]
    %v1598 = vld [vmem:[%s9 + $0x4] sm:$0xf]
    %v1599 = vld [vmem:[%s9 + $0x8] sm:$0xf]
    %v1600 = vld [vmem:[%s9 + $0xc] sm:$0xf]
    %v1601 = vld [vmem:[%s9 + $0x10] sm:$0xf]
    %v1602 = vld [vmem:[%s9 + $0x14] sm:$0xf]
    %v1603 = vld [vmem:[%s9 + $0x18] sm:$0xf]
    %v1604 = vld [vmem:[%s9 + $0x1c] sm:$0xf]
    %v1605 = vld [vmem:[%s9 + $0x20] sm:$0xf]
    %v1606 = vld [vmem:[%s9 + $0x24] sm:$0xf]
    %v1607 = vld [vmem:[%s9 + $0x28] sm:$0xf]
    %v1608 = vld [vmem:[%s9 + $0x2c] sm:$0xf]
    %v1609 = vld [vmem:[%s10] sm:$0x1]
    %v1611 = vlaneseq
    %v1612 = vshrl.u32 %v1611, 7
    %v1613 = vsub.s32 0, %v1612
    %v1614 = vrot.slane %v1609, %v1613
    %v1632 = vunpack.c.l.b16 %v1581
    %v1633 = vunpack.c.l.b16 %v1582
    %v1634 = vunpack.c.l.b16 %v1583
    %v1635 = vunpack.c.l.b16 %v1584
    %v1636 = vunpack.c.l.b16 %v1585
    %v1637 = vunpack.c.l.b16 %v1586
    %v1638 = vunpack.c.l.b16 %v1587
    %v1639 = vunpack.c.l.b16 %v1588
    %v1640 = vunpack.c.l.b16 %v1589
    %v1641 = vunpack.c.l.b16 %v1590
    %v1642 = vunpack.c.l.b16 %v1591
    %v1643 = vunpack.c.l.b16 %v1592
    %v1644 = vunpack.c.l.b16 %v1593
    %v1645 = vunpack.c.l.b16 %v1594
    %v1646 = vunpack.c.l.b16 %v1595
    %v1647 = vunpack.c.l.b16 %v1596
    %vm1648 = vcmask 1041409
    %v1649 = vsel %vm1648, %v1633, %v1632
    %vm1650 = vcmask 1042434
    %v1651 = vsel %vm1650, %v1634, %v1649
    %vm1652 = vcmask 1043459
    %v1653 = vsel %vm1652, %v1635, %v1651
    %vm1654 = vcmask 1044484
    %v1655 = vsel %vm1654, %v1636, %v1653
    %vm1656 = vcmask 1045509
    %v1657 = vsel %vm1656, %v1637, %v1655
    %vm1658 = vcmask 1046534
    %v1659 = vsel %vm1658, %v1638, %v1657
    %vm1660 = vcmask 1047559
    %v1661 = vsel %vm1660, %v1639, %v1659
    %v1662 = vsel %vm1648, %v1641, %v1640
    %v1663 = vsel %vm1650, %v1642, %v1662
    %v1664 = vsel %vm1652, %v1643, %v1663
    %v1665 = vsel %vm1654, %v1644, %v1664
    %v1666 = vsel %vm1656, %v1645, %v1665
    %v1667 = vsel %vm1658, %v1646, %v1666
    %v1668 = vsel %vm1660, %v1647, %v1667
    %v1669 = vpack.c.b16 %v1668, %v1661
    %v1682 = vunpack.c.l.b16 %v1597
    %v1683 = vunpack.c.l.b16 %v1598
    %v1684 = vunpack.c.l.b16 %v1599
    %v1685 = vunpack.c.l.b16 %v1600
    %v1686 = vunpack.c.l.b16 %v1601
    %v1687 = vunpack.c.l.b16 %v1602
    %v1688 = vunpack.c.l.b16 %v1603
    %v1689 = vunpack.c.l.b16 %v1604
    %v1690 = vunpack.c.l.b16 %v1605
    %v1691 = vunpack.c.l.b16 %v1606
    %v1692 = vunpack.c.l.b16 %v1607
    %v1693 = vunpack.c.l.b16 %v1608
    %v1694 = vpack.c.b16 %v1683, %v1682
    %v1695 = vpack.c.b16 %v1685, %v1684
    %v1696 = vpack.c.b16 %v1687, %v1686
    %v1697 = vpack.c.b16 %v1689, %v1688
    %v1698 = vpack.c.b16 %v1691, %v1690
    %v1699 = vpack.c.b16 %v1693, %v1692
    %v1707 = vsel %vm167, %v1669, 0
    %1709 = vmatprep.subr.bf16.mxu0 0
    %1710 = vmatpush1.bf16.msra.mxu0 %v1694
    %1711 = vmatprep.subr.bf16.mxu0 0
    %1712 = vmatpush1.bf16.msra.mxu0 %v1695
    %1713 = vmatprep.subr.bf16.mxu0 0
    %1714 = vmatpush1.bf16.msra.mxu0 %v1696
    %1715 = vmatprep.subr.bf16.mxu0 0
    %1716 = vmatpush1.bf16.msra.mxu0 %v1697
    %1717 = vmatprep.subr.bf16.mxu0 0
    %1718 = vmatpush1.bf16.msra.mxu0 %v1698
    %1719 = vmatprep.subr.bf16.mxu0 0
    %1720 = vmatpush1.bf16.msra.mxu0 %v1699
    %1721 = vmatprep.subr.bf16.mxu0 0
    %1722 = vmatpush1.bf16.msra.mxu0 0
    %1723 = vmatprep.subr.bf16.mxu0 0
    %1724 = vmatpush1.bf16.msra.mxu0 0
    %1725 = vmatprep.subr.bf16.mxu0 0
    %1726 = vmatpush1.bf16.msra.mxu0 0
    %1727 = vmatprep.subr.bf16.mxu0 0
    %1728 = vmatpush1.bf16.msra.mxu0 0
    %1729 = vmatprep.subr.bf16.mxu0 0
    %1730 = vmatpush1.bf16.msra.mxu0 0
    %1731 = vmatprep.subr.bf16.mxu0 0
    %1732 = vmatpush1.bf16.msra.mxu0 0
    %1733 = vmatprep.subr.bf16.mxu0 0
    %1734 = vmatpush1.bf16.msra.mxu0 0
    %1735 = vmatprep.subr.bf16.mxu0 0
    %1736 = vmatpush1.bf16.msra.mxu0 0
    %1737 = vmatprep.subr.bf16.mxu0 0
    %1738 = vmatpush1.bf16.msra.mxu0 0
    %1739 = vmatprep.subr.bf16.mxu0 0
    %1740 = vmatpush1.bf16.msra.mxu0 0
    %1741 = vmatprep.mubr.bf16.mxu0 0
    %1742 = vmatmul.mubr.bf16.gmra.mrb[0].mxu0 %v1707
    %v1743 = vpop.f32.mrb[0].mxu0
    %v1744 = vadd.f32 %v1614, %v1743
    %v1745 = vpop.f32.mrb[0].mxu0
    %v1746 = vpop.f32.mrb[0].mxu0
    %v1747 = vadd.f32 %v1614, %v1746
    %v1748 = vpop.f32.mrb[0].mxu0
    %1749 = vdwg.mxu0
    %v1750 = vadd.f32 %v1744, %v434
    %v1751 = vadd.f32 %v1747, %v435
    %v1752 = vsel %vm167, %v1750, 0.0
    %1753 = vadd.xlane.f32.xlu0 %v1752
    %v1754 = vpop.xlane.xlu0 %1753
    %v1755 = vsel %vm167, %v1751, 0.0
    %1756 = vadd.xlane.f32.xlu0 %v1755
    %v1757 = vpop.xlane.xlu0 %1756
    %v1758 = vrcp.pop 96.0
    %v1759 = vmul.f32 %v1754, %v1758
    %v1760 = vmul.f32 %v1757, %v1758
    %v1761 = vsub.f32 %v1750, %v1759
    %v1762 = vsub.f32 %v1751, %v1760
    %v1763 = vmul.f32 %v1761, %v1761
    %v1764 = vmul.f32 %v1762, %v1762
    %v1765 = vsel %vm167, %v1763, 0.0
    %1766 = vadd.xlane.f32.xlu0 %v1765
    %v1767 = vpop.xlane.xlu0 %1766
    %v1768 = vsel %vm167, %v1764, 0.0
    %1769 = vadd.xlane.f32.xlu0 %v1768
    %v1770 = vpop.xlane.xlu0 %1769
    %v1771 = vmul.f32 %v1767, %v1758
    %v1772 = vmul.f32 %v1770, %v1758
    %v1773 = vadd.f32 %v1771, 1e-05
    %v1774 = vadd.f32 %v1772, 1e-05
    %v1775 = vrsqrt.pop %v1773
    %v1776 = vrsqrt.pop %v1774
    %v1777 = vmul.f32 %v1761, %v1775
    %v1778 = vmul.f32 %v1762, %v1776
    %v1779 = vld [vmem:[%s11] sm:$0x1]
    %v1781 = vlaneseq
    %v1782 = vshrl.u32 %v1781, 7
    %v1783 = vsub.s32 0, %v1782
    %v1784 = vrot.slane %v1779, %v1783
    %v1786 = vmul.f32 %v1777, %v1784
    %v1787 = vmul.f32 %v1778, %v1784
    %v1788 = vld [vmem:[%s12] sm:$0x1]
    %v1790 = vlaneseq
    %v1791 = vshrl.u32 %v1790, 7
    %v1792 = vsub.s32 0, %v1791
    %v1793 = vrot.slane %v1788, %v1792
    %v1795 = vadd.f32 %v1786, %v1793
    %v1796 = vadd.f32 %v1787, %v1793
    %v1797 = vpack.c.bf16 %v1796, %v1795
    %v1798 = vld [vmem:[%s13] sm:$0xf]
    %v1799 = vld [vmem:[%s13 + $0x4] sm:$0xf]
    %v1800 = vld [vmem:[%s13 + $0x8] sm:$0xf]
    %v1801 = vld [vmem:[%s13 + $0xc] sm:$0xf]
    %v1802 = vld [vmem:[%s13 + $0x10] sm:$0xf]
    %v1803 = vld [vmem:[%s13 + $0x14] sm:$0xf]
    %v1804 = vld [vmem:[%s13 + $0x18] sm:$0xf]
    %v1805 = vld [vmem:[%s13 + $0x1c] sm:$0xf]
    %v1806 = vld [vmem:[%s13 + $0x20] sm:$0xf]
    %v1807 = vld [vmem:[%s13 + $0x24] sm:$0xf]
    %v1808 = vld [vmem:[%s13 + $0x28] sm:$0xf]
    %v1809 = vld [vmem:[%s13 + $0x2c] sm:$0xf]
    %v1810 = vld [vmem:[%s1] sm:$0xf]
    %v1811 = vld [vmem:[%s1 + $0x4] sm:$0xf]
    %v1812 = vld [vmem:[%s14] sm:$0xf]
    %v1813 = vld [vmem:[%s14 + $0x4] sm:$0xf]
    %v1814 = vld [vmem:[%s14 + $0x8] sm:$0xf]
    %v1815 = vld [vmem:[%s14 + $0xc] sm:$0xf]
    %v1818 = vunpack.c.l.b16 %v1810
    %v1819 = vunpack.c.l.b16 %v1811
    %v1820 = vpack.c.b16 %v1819, %v1818
    %v1825 = vunpack.c.l.b16 %v1812
    %v1826 = vunpack.c.l.b16 %v1813
    %v1827 = vunpack.c.l.b16 %v1814
    %v1828 = vunpack.c.l.b16 %v1815
    %v1829 = vpack.c.b16 %v1826, %v1825
    %v1830 = vpack.c.b16 %v1828, %v1827
    %vm1833 = vcmask 261120
    %v1835 = vsel %vm1833, %v1820, 0
    %1837 = vmatprep.subr.bf16.mxu0 0
    %1838 = vmatpush1.bf16.msra.mxu0 %v1829
    %1839 = vmatprep.subr.bf16.mxu0 0
    %1840 = vmatpush1.bf16.msra.mxu0 %v1830
    %1841 = vmatprep.subr.bf16.mxu0 0
    %1842 = vmatpush1.bf16.msra.mxu0 0
    %1843 = vmatprep.subr.bf16.mxu0 0
    %1844 = vmatpush1.bf16.msra.mxu0 0
    %1845 = vmatprep.subr.bf16.mxu0 0
    %1846 = vmatpush1.bf16.msra.mxu0 0
    %1847 = vmatprep.subr.bf16.mxu0 0
    %1848 = vmatpush1.bf16.msra.mxu0 0
    %1849 = vmatprep.subr.bf16.mxu0 0
    %1850 = vmatpush1.bf16.msra.mxu0 0
    %1851 = vmatprep.subr.bf16.mxu0 0
    %1852 = vmatpush1.bf16.msra.mxu0 0
    %1853 = vmatprep.subr.bf16.mxu0 0
    %1854 = vmatpush1.bf16.msra.mxu0 0
    %1855 = vmatprep.subr.bf16.mxu0 0
    %1856 = vmatpush1.bf16.msra.mxu0 0
    %1857 = vmatprep.subr.bf16.mxu0 0
    %1858 = vmatpush1.bf16.msra.mxu0 0
    %1859 = vmatprep.subr.bf16.mxu0 0
    %1860 = vmatpush1.bf16.msra.mxu0 0
    %1861 = vmatprep.subr.bf16.mxu0 0
    %1862 = vmatpush1.bf16.msra.mxu0 0
    %1863 = vmatprep.subr.bf16.mxu0 0
    %1864 = vmatpush1.bf16.msra.mxu0 0
    %1865 = vmatprep.subr.bf16.mxu0 0
    %1866 = vmatpush1.bf16.msra.mxu0 0
    %1867 = vmatprep.subr.bf16.mxu0 0
    %1868 = vmatpush1.bf16.msra.mxu0 0
    %1869 = vmatprep.mubr.bf16.mxu0 0
    %1870 = vmatmul.mubr.bf16.gmra.mrb[0].mxu0 %v1835
    %v1871 = vpop.f32.mrb[0].mxu0
    %v1872 = vadd.f32 0.0, %v1871
    %v1873 = vpop.f32.mrb[0].mxu0
    %v1874 = vpop.f32.mrb[0].mxu0
    %v1875 = vadd.f32 0.0, %v1874
    %v1876 = vpop.f32.mrb[0].mxu0
    %1877 = vdwg.mxu0
    %v1890 = vunpack.c.l.b16 %v1798
    %v1891 = vunpack.c.l.b16 %v1799
    %v1892 = vunpack.c.l.b16 %v1800
    %v1893 = vunpack.c.l.b16 %v1801
    %v1894 = vunpack.c.l.b16 %v1802
    %v1895 = vunpack.c.l.b16 %v1803
    %v1896 = vunpack.c.l.b16 %v1804
    %v1897 = vunpack.c.l.b16 %v1805
    %v1898 = vunpack.c.l.b16 %v1806
    %v1899 = vunpack.c.l.b16 %v1807
    %v1900 = vunpack.c.l.b16 %v1808
    %v1901 = vunpack.c.l.b16 %v1809
    %v1902 = vpack.c.b16 %v1891, %v1890
    %v1903 = vpack.c.b16 %v1893, %v1892
    %v1904 = vpack.c.b16 %v1895, %v1894
    %v1905 = vpack.c.b16 %v1897, %v1896
    %v1906 = vpack.c.b16 %v1899, %v1898
    %v1907 = vpack.c.b16 %v1901, %v1900
    %v1915 = vsel %vm167, %v1797, 0
    %1917 = vmatprep.subr.bf16.mxu0 0
    %1918 = vmatpush1.bf16.msra.mxu0 %v1902
    %1919 = vmatprep.subr.bf16.mxu0 0
    %1920 = vmatpush1.bf16.msra.mxu0 %v1903
    %1921 = vmatprep.subr.bf16.mxu0 0
    %1922 = vmatpush1.bf16.msra.mxu0 %v1904
    %1923 = vmatprep.subr.bf16.mxu0 0
    %1924 = vmatpush1.bf16.msra.mxu0 %v1905
    %1925 = vmatprep.subr.bf16.mxu0 0
    %1926 = vmatpush1.bf16.msra.mxu0 %v1906
    %1927 = vmatprep.subr.bf16.mxu0 0
    %1928 = vmatpush1.bf16.msra.mxu0 %v1907
    %1929 = vmatprep.subr.bf16.mxu0 0
    %1930 = vmatpush1.bf16.msra.mxu0 0
    %1931 = vmatprep.subr.bf16.mxu0 0
    %1932 = vmatpush1.bf16.msra.mxu0 0
    %1933 = vmatprep.subr.bf16.mxu0 0
    %1934 = vmatpush1.bf16.msra.mxu0 0
    %1935 = vmatprep.subr.bf16.mxu0 0
    %1936 = vmatpush1.bf16.msra.mxu0 0
    %1937 = vmatprep.subr.bf16.mxu0 0
    %1938 = vmatpush1.bf16.msra.mxu0 0
    %1939 = vmatprep.subr.bf16.mxu0 0
    %1940 = vmatpush1.bf16.msra.mxu0 0
    %1941 = vmatprep.subr.bf16.mxu0 0
    %1942 = vmatpush1.bf16.msra.mxu0 0
    %1943 = vmatprep.subr.bf16.mxu0 0
    %1944 = vmatpush1.bf16.msra.mxu0 0
    %1945 = vmatprep.subr.bf16.mxu0 0
    %1946 = vmatpush1.bf16.msra.mxu0 0
    %1947 = vmatprep.subr.bf16.mxu0 0
    %1948 = vmatpush1.bf16.msra.mxu0 0
    %1949 = vmatprep.mubr.bf16.mxu0 0
    %1950 = vmatmul.mubr.bf16.gmra.mrb[0].mxu0 %v1915
    %v1951 = vpop.f32.mrb[0].mxu0
    %v1952 = vadd.f32 %v1872, %v1951
    %v1953 = vpop.f32.mrb[0].mxu0
    %v1954 = vpop.f32.mrb[0].mxu0
    %v1955 = vadd.f32 %v1875, %v1954
    %v1956 = vpop.f32.mrb[0].mxu0
    %1957 = vdwg.mxu0
    %v1958 = vld [vmem:[%s15] sm:$0x1]
    %v1960 = vlaneseq
    %v1961 = vshrl.u32 %v1960, 7
    %v1962 = vsub.s32 0, %v1961
    %v1963 = vrot.slane %v1958, %v1962
    %v1965 = vadd.f32 %v1952, %v1963
    %v1966 = vadd.f32 %v1955, %v1963
    %v1967 = vmax.f32 %v1965, 0.0
    %v1968 = vmax.f32 %v1966, 0.0
    %v1969 = vpack.c.bf16 %v1968, %v1967
    %v1970 = vld [vmem:[%s16] sm:$0xf]
    %v1971 = vld [vmem:[%s16 + $0x4] sm:$0xf]
    %v1972 = vld [vmem:[%s16 + $0x8] sm:$0xf]
    %v1973 = vld [vmem:[%s16 + $0xc] sm:$0xf]
    %v1974 = vld [vmem:[%s17] sm:$0x1]
    %v1976 = vlaneseq
    %v1977 = vshrl.u32 %v1976, 7
    %v1978 = vsub.s32 0, %v1977
    %v1979 = vrot.slane %v1974, %v1978
    %v1985 = vunpack.c.l.b16 %v1970
    %v1986 = vunpack.c.l.b16 %v1971
    %v1987 = vunpack.c.l.b16 %v1972
    %v1988 = vunpack.c.l.b16 %v1973
    %v1989 = vpack.c.b16 %v1986, %v1985
    %v1990 = vpack.c.b16 %v1988, %v1987
    %v1994 = vsel %vm1833, %v1969, 0
    %1996 = vmatprep.subr.bf16.mxu0 0
    %1997 = vmatpush1.bf16.msra.mxu0 %v1989
    %1998 = vmatprep.subr.bf16.mxu0 0
    %1999 = vmatpush1.bf16.msra.mxu0 %v1990
    %2000 = vmatprep.subr.bf16.mxu0 0
    %2001 = vmatpush1.bf16.msra.mxu0 0
    %2002 = vmatprep.subr.bf16.mxu0 0
    %2003 = vmatpush1.bf16.msra.mxu0 0
    %2004 = vmatprep.subr.bf16.mxu0 0
    %2005 = vmatpush1.bf16.msra.mxu0 0
    %2006 = vmatprep.subr.bf16.mxu0 0
    %2007 = vmatpush1.bf16.msra.mxu0 0
    %2008 = vmatprep.subr.bf16.mxu0 0
    %2009 = vmatpush1.bf16.msra.mxu0 0
    %2010 = vmatprep.subr.bf16.mxu0 0
    %2011 = vmatpush1.bf16.msra.mxu0 0
    %2012 = vmatprep.subr.bf16.mxu0 0
    %2013 = vmatpush1.bf16.msra.mxu0 0
    %2014 = vmatprep.subr.bf16.mxu0 0
    %2015 = vmatpush1.bf16.msra.mxu0 0
    %2016 = vmatprep.subr.bf16.mxu0 0
    %2017 = vmatpush1.bf16.msra.mxu0 0
    %2018 = vmatprep.subr.bf16.mxu0 0
    %2019 = vmatpush1.bf16.msra.mxu0 0
    %2020 = vmatprep.subr.bf16.mxu0 0
    %2021 = vmatpush1.bf16.msra.mxu0 0
    %2022 = vmatprep.subr.bf16.mxu0 0
    %2023 = vmatpush1.bf16.msra.mxu0 0
    %2024 = vmatprep.subr.bf16.mxu0 0
    %2025 = vmatpush1.bf16.msra.mxu0 0
    %2026 = vmatprep.subr.bf16.mxu0 0
    %2027 = vmatpush1.bf16.msra.mxu0 0
    %2028 = vmatprep.mubr.bf16.mxu0 0
    %2029 = vmatmul.mubr.bf16.gmra.mrb[0].mxu0 %v1994
    %v2030 = vpop.f32.mrb[0].mxu0
    %v2031 = vadd.f32 %v1979, %v2030
    %v2032 = vpop.f32.mrb[0].mxu0
    %v2033 = vpop.f32.mrb[0].mxu0
    %v2034 = vadd.f32 %v1979, %v2033
    %v2035 = vpop.f32.mrb[0].mxu0
    %2036 = vdwg.mxu0
    %2037 = vst.msk [vmem:[#allocation2] sm:$0xff] %vm1833, %v2031
    %2038 = vst.msk [vmem:[#allocation2 + $0x8] sm:$0xff] %vm1833, %v2034
    // Predicated region
    $region74: #{tpu_custom_call.1} parent=1 // pred_check
      _
    $region75: #{tpu_custom_call.1} parent=1 // pred_check_branch
      %2040 = sbr.rel (0) target = $region77
    $region76: #{tpu_custom_call.1} parent=1 // pred_region
      %s2042 = ssub.s32 256, 256
      %2043 = vsyncadd [#allocation3], %s2042
      %s2044 = sshll.u32 [#allocation2], 4
      %s2045 = int_to_ptr.vmem [resolvable:$true] %s2044
      %2050 = dma.vmem_to_hbm [thread:$0]  %s2045, 256, %s18, [#allocation3], 128, 128, 8
    $region77: #{tpu_custom_call.1} parent=1 // pred_fallthru
      _
    // Predicated region
    $region78: #{tpu_custom_call.1} parent=1 // pred_check
      _
    $region79: #{tpu_custom_call.1} parent=1 // pred_check_branch
      %2052 = sbr.rel (0) target = $region81
    $region80: #{tpu_custom_call.1} parent=1 // pred_region
      _
    $region81: #{tpu_custom_call.1} parent=1 // pred_fallthru
      _
    // Predicated region
    $region82: #{tpu_custom_call.1} parent=1 // pred_check
      _
    $region83: #{tpu_custom_call.1} parent=1 // pred_check_branch
      %2054 = sbr.rel (0) target = $region85
    $region84: #{tpu_custom_call.1} parent=1 // pred_region
      %2055 = dma.done [#allocation3], 256
    $region85: #{tpu_custom_call.1} parent=1 // pred_fallthru
      _
    // Predicated region
    $region86: #{tpu_custom_call.1} parent=1 // pred_check
      _
    $region87: #{tpu_custom_call.1} parent=1 // pred_check_branch
      %2057 = sbr.rel (0) target = $region89
    $region88: #{tpu_custom_call.1} parent=1 // pred_region
      _
    $region89: #{tpu_custom_call.1} parent=1 // pred_fallthru
      _
    %2058 = vsyncpa [#allocation3], 1

</llo_original>
